<compile_context>
chip_gen: v5e
topology: v5e:2x2
jax: 0.10.0
libtpu: 0.0.40
codegen_flags: <defaults>
</compile_context>

<pallas_src>
import jax
import jax.numpy as jnp
from jax import lax
from jax.experimental import pallas as pl
from jax.experimental.pallas import tpu as pltpu


# --------------------------------------------------------------------------------------
# Kernel
# --------------------------------------------------------------------------------------
def _make_rga_kernel(C, S, BT, Cc, Si, Ns2, Nc2, cdt):
    f32 = jnp.float32

    def dg(a, b, ca, cb):
        # dot_general with explicit contraction dims -> no explicit .T on activations
        return lax.dot_general(a, b, (((ca,), (cb,)), ((), ())),
                               preferred_element_type=f32)

    def dot(a, b):
        return jnp.dot(a, b, preferred_element_type=f32)

    def kernel(x_ref, wspa_ref, wggp_ref, ws1gg_ref, ws2_ref,
               wcha_ref, wggcp_ref, wc1gg_ref, wc2c_ref, bp_ref, sc_ref, out_ref):
        relu = lambda v: jnp.maximum(v, 0.0)

        x_aug = x_ref[...]                       # (C+1, BT*S) f32, last row == 1
        x = x_aug[:C, :]                         # (C, BT*S) original activations

        bp = bp_ref[...]                         # (R, 7) packed per-channel bias columns
        b_cha = bp[:3 * Si, 0:1]
        bgg   = bp[:Si,     1:2]
        bggc  = bp[:Cc,     2:3]
        ws1_g = bp[:Ns2,    3:4]
        bs1   = bp[:Ns2,    4:5]
        wc1_g = bp[:Nc2,    5:6]
        bc1   = bp[:Nc2,    6:7]
        bs2 = sc_ref[0]                          # true scalars: free SMEM sreg reads
        bc2 = sc_ref[1]

        wgg_in, wgg_out = wggp_ref[0], wggp_ref[1]        # (Si, S)  f32
        wggc_in, wggc_out = wggcp_ref[0], wggcp_ref[1]    # (Cc, C)  f32
        ws1gg = ws1gg_ref[...]                            # (Ns2, Si) cdt
        ws2 = ws2_ref[...]                                # (1, Ns2)  cdt
        wc1gg = wc1gg_ref[...]                            # (Nc2, Cc) f32
        wc2c = wc2c_ref[...]                              # (Nc2, 1)  f32
        wcha = wcha_ref[...]                              # (3Si, S)  cdt

        # ---- fused theta|phi|gx spatial 1x1 convs: ONE wide lane-dense matmul ----
        tpg = relu(dot(wspa_ref[...], x_aug.astype(cdt)))            # (3Cc, BT*S) f32
        theta = tpg[0 * Cc:1 * Cc]                                   # (Cc, BT*S)
        phi = tpg[1 * Cc:2 * Cc]
        gxm = jnp.mean(tpg[2 * Cc:3 * Cc], axis=0, keepdims=True)    # (1, BT*S)

        # ---- spatial relation: per-batch Grams via associativity (small dots in f32) ----
        # TODO(synk): for configs with many batches per grid step, the first dot of each
        # gate could be widened across BT to better feed the 256-wide MXU on v6e/v7x.
        gg_parts = []
        for b in range(BT):                      # BT == max(1, 128 // S): tiny static unroll
            lo, hi = b * S, (b + 1) * S
            th = theta[:, lo:hi]                                     # (Cc, S) f32
            ph = phi[:, lo:hi]
            # wgg_in @ Gs^T = (wgg_in @ phi^T) @ theta ; wgg_out @ Gs = (wgg_out @ theta^T) @ phi
            a_in = dg(wgg_in, ph, 1, 1)                              # (Si, Cc) contract S
            a_out = dg(wgg_out, th, 1, 1)                            # (Si, Cc)
            gg_parts.append(dot(a_in, th) + dot(a_out, ph))          # (Si, S)
        gg_pre = gg_parts[0] if BT == 1 else jnp.concatenate(gg_parts, axis=1)
        gg = relu(gg_pre + bgg)                                      # (Si, BT*S), bias once

        # ---- spatial gate: lane-dense matmuls across the whole 128-lane block ----
        h1 = relu(ws1_g * gxm + dot(ws1gg, gg.astype(cdt)) + bs1)    # (Ns2, BT*S)
        wys = dot(ws2, h1.astype(cdt)) + bs2                         # (1, BT*S)
        x_s = jax.nn.sigmoid(wys) * x                                # (C, BT*S) f32
        x_s_c = x_s.astype(cdt)                                      # single hoisted cast

        # ---- channel gate: biases pre-broadcast ONCE outside the per-batch loop ----
        b_cha_t = jnp.broadcast_to(b_cha, (3 * Si, C))
        bggc_t = jnp.broadcast_to(bggc, (Cc, C))
        wc1g_t = jnp.broadcast_to(wc1_g, (Nc2, C))
        bc1_t = jnp.broadcast_to(bc1, (Nc2, C))
        out_parts = []
        for b in range(BT):
            lo, hi = b * S, (b + 1) * S
            xs_c = x_s_c[:, lo:hi]                                   # (C, S) cdt
            # fused theta|phi|gx channel convs: contract S directly (no xs.T)
            tpgc = relu(dg(wcha, xs_c, 1, 1) + b_cha_t)              # (3Si, C) f32
            thc = tpgc[0 * Si:1 * Si]
            phc = tpgc[1 * Si:2 * Si]
            gxcm = jnp.mean(tpgc[2 * Si:3 * Si], axis=0, keepdims=True)   # (1, C)
            gc = dg(thc, phc, 0, 0)                                  # (C, C) f32 Gram
            # wggc_in @ Gc^T and wggc_out @ Gc, bias once
            ggc = relu(dg(wggc_in, gc, 1, 1) + dot(wggc_out, gc) + bggc_t)   # (Cc, C)
            hc1 = relu(wc1g_t * gxcm + dot(wc1gg, ggc) + bc1_t)      # (Nc2, C)
            wyc_col = dg(hc1, wc2c, 0, 0) + bc2                      # (C, 1) column, no .T
            out_parts.append(jax.nn.sigmoid(wyc_col) * x_s[:, lo:hi])  # (C, S)
        # one full lane-width (128-aligned) store per grid step
        out_ref[...] = out_parts[0] if BT == 1 else jnp.concatenate(out_parts, axis=1)

    return kernel


# --------------------------------------------------------------------------------------
# Wrapper: host-side folding / packing + pallas_call
# --------------------------------------------------------------------------------------
def rga_module(x, params, compute_dtype=jnp.bfloat16, batch_block=None,
               vmem_limit_bytes=32 * 1024 * 1024):
    """RGA forward. x: (B, C, H, W) float32 -> (B, C, H, W) float32."""
    B, C, H, W = x.shape
    S = H * W
    Cc = params["wt"].shape[0]
    Si = params["wgg"].shape[0]
    Ns2 = params["ws1"].shape[0]
    Nc2 = params["wc1"].shape[0]
    cdt = compute_dtype

    # Grid sizing: smallest BT with (BT*S) % 128 == 0 and B % BT == 0 -> maximum number
    # of grid steps (NB >= 2 whenever B*S >= 256), lane-aligned blocks, pipelining + both
    # v7x TCs.  Weight/VMEM footprint at these tiles is far below the 32 MiB scoped limit.
    if batch_block is None:
        BT = next((c for c in range(1, B + 1)
                   if B % c == 0 and (c * S) % 128 == 0), B)
    else:
        BT = batch_block
    assert B % BT == 0, "batch_block must divide the batch"
    lane = BT * S
    assert lane % 128 == 0 or BT == B, \
        "batch_block * spatial must be a multiple of 128 (lane-aligned blocks)"
    NB = B // BT

    # lane-dense activations (C, B*S) + ones row to fold the fused stage-1 biases
    xl = jnp.transpose(x.reshape(B, C, S), (1, 0, 2)).reshape(C, B * S)
    x_aug = jnp.concatenate([xl, jnp.ones((1, B * S), xl.dtype)], axis=0).astype(jnp.float32)

    # fused theta|phi|gx spatial conv (BN folded), bias column appended -> compute dtype
    w_spa = jnp.concatenate([params["wt"], params["wp"], params["wgx"]], axis=0)     # (3Cc, C)
    b_spa = jnp.concatenate([params["bt"], params["bp"], params["bgx"]], axis=0)     # (3Cc, 1)
    w_spa_aug = jnp.concatenate([w_spa, b_spa], axis=1).astype(cdt)                  # (3Cc, C+1)

    wgg = params["wgg"]
    wgg_pair = jnp.stack([wgg[:, :S], wgg[:, S:]], axis=0).astype(jnp.float32)       # (2, Si, S)
    ws1 = params["ws1"]
    ws1_gg = ws1[:, 1:].astype(cdt)                                                  # (Ns2, Si)
    ws2 = params["ws2"].astype(cdt)                                                  # (1, Ns2)

    w_cha = jnp.concatenate([params["wtc"], params["wpc"], params["wgxc"]],
                            axis=0).astype(cdt)                                      # (3Si, S)
    b_cha = jnp.concatenate([params["btc"], params["bpc"], params["bgxc"]], axis=0)  # (3Si, 1)
    wggc = params["wggc"]
    wggc_pair = jnp.stack([wggc[:, :C], wggc[:, C:]], axis=0).astype(jnp.float32)    # (2, Cc, C)
    wc1 = params["wc1"]
    wc1_gg = wc1[:, 1:].astype(jnp.float32)                                          # (Nc2, Cc)
    wc2_col = params["wc2"].reshape(-1, 1).astype(jnp.float32)                       # (Nc2, 1)

    # per-output-channel bias/column vectors packed into ONE small VMEM tile;
    # the two true scalars (bs2, bc2) go to SMEM instead.
    R = max(3 * Si, Si, Ns2, Nc2, Cc)

    def _col(v):
        return jnp.zeros((R, 1), jnp.float32).at[: v.shape[0]].set(v.astype(jnp.float32))

    bias_pack = jnp.concatenate(
        [_col(b_cha), _col(params["bgg"]), _col(params["bggc"]),
         _col(ws1[:, 0:1]), _col(params["bs1"]),
         _col(wc1[:, 0:1]), _col(params["bc1"])], axis=1)                            # (R, 7)
    scalars = jnp.concatenate([params["bs2"].reshape(-1),
                               params["bc2"].reshape(-1)]).astype(jnp.float32)       # (2,)

    kernel = _make_rga_kernel(C, S, BT, Cc, Si, Ns2, Nc2, cdt)

    def const_spec(a):
        return pl.BlockSpec(a.shape, lambda i, _nd=a.ndim: (0,) * _nd)

    weight_args = [w_spa_aug, wgg_pair, ws1_gg, ws2, w_cha, wggc_pair,
                   wc1_gg, wc2_col, bias_pack]
    in_specs = [pl.BlockSpec((C + 1, lane), lambda i: (0, i))]
    in_specs += [const_spec(a) for a in weight_args]
    in_specs += [pl.BlockSpec(memory_space=pltpu.MemorySpace.SMEM)]

    out = pl.pallas_call(
        kernel,
        out_shape=jax.ShapeDtypeStruct((C, B * S), jnp.float32),
        grid=(NB,),
        in_specs=in_specs,
        out_specs=pl.BlockSpec((C, lane), lambda i: (0, i)),
        compiler_params=pltpu.CompilerParams(
            dimension_semantics=("parallel",),
            vmem_limit_bytes=vmem_limit_bytes),
    )(x_aug, *weight_args, scalars)

    return jnp.transpose(out.reshape(C, B, S), (1, 0, 2)).reshape(B, C, H, W)


# --------------------------------------------------------------------------------------
# Deterministic parameter construction (Conv2d 1x1 + eval-mode BatchNorm folded to W, b)
# --------------------------------------------------------------------------------------
def make_params(key, C, S, cha_ratio=2, spa_ratio=2, down_ratio=2):
    Cc = C // cha_ratio
    Si = S // spa_ratio
    Ns = 1 + Si
    Ns2 = Ns // down_ratio
    Nc = 1 + Cc
    Nc2 = Nc // down_ratio
    specs = {
        "wt": (Cc, C), "wp": (Cc, C), "wgx": (Cc, C),
        "wgg": (Si, 2 * S),
        "ws1": (Ns2, Ns), "ws2": (1, Ns2),
        "wtc": (Si, S), "wpc": (Si, S), "wgxc": (Si, S),
        "wggc": (Cc, 2 * C),
        "wc1": (Nc2, Nc), "wc2": (1, Nc2),
    }
    params = {}
    for name, shape in specs.items():
        key, kw, kg, kb, km, kv = jax.random.split(key, 6)
        out_ch, in_ch = shape
        w = jax.random.normal(kw, shape, jnp.float32) / jnp.sqrt(jnp.float32(in_ch))
        gamma = 1.0 + 0.1 * jax.random.normal(kg, (out_ch,), jnp.float32)
        beta = 0.1 * jax.random.normal(kb, (out_ch,), jnp.float32)
        mean = 0.1 * jax.random.normal(km, (out_ch,), jnp.float32)
        var = 1.0 + 0.1 * jax.random.uniform(kv, (out_ch,), jnp.float32)
        scale = gamma / jnp.sqrt(var + 1e-5)            # BN folded (eval mode)
        params[name] = w * scale[:, None]
        params["b" + name[1:]] = (beta - mean * scale)[:, None]
    return params


# --------------------------------------------------------------------------------------
# Pure-JAX reference mirroring the PyTorch module (f32)
# --------------------------------------------------------------------------------------
def _conv_bn(x, w, b, act=True):
    y = jnp.einsum("oi,bihw->bohw", w, x) + b.reshape(1, -1, 1, 1)
    return jnp.maximum(y, 0.0) if act else y


def ref_forward(x, p):
    b, c, h, w = x.shape
    S = h * w
    theta_xs = _conv_bn(x, p["wt"], p["bt"]).reshape(b, -1, S).transpose(0, 2, 1)
    phi_xs = _conv_bn(x, p["wp"], p["bp"]).reshape(b, -1, S)
    Gs = theta_xs @ phi_xs
    Gs_in = Gs.transpose(0, 2, 1).reshape(b, S, h, w)
    Gs_out = Gs.reshape(b, S, h, w)
    Gs_joint = _conv_bn(jnp.concatenate([Gs_in, Gs_out], 1), p["wgg"], p["bgg"])
    g_xs = jnp.mean(_conv_bn(x, p["wgx"], p["bgx"]), axis=1, keepdims=True)
    ys = jnp.concatenate([g_xs, Gs_joint], 1)
    wys = _conv_bn(_conv_bn(ys, p["ws1"], p["bs1"]), p["ws2"], p["bs2"], act=False)
    x = jax.nn.sigmoid(wys) * x
    xc = x.reshape(b, c, S).transpose(0, 2, 1)[..., None]            # (b, S, c, 1)
    theta_xc = _conv_bn(xc, p["wtc"], p["btc"])[..., 0].transpose(0, 2, 1)
    phi_xc = _conv_bn(xc, p["wpc"], p["bpc"])[..., 0]
    Gc = theta_xc @ phi_xc
    Gc_joint = jnp.concatenate([Gc.transpose(0, 2, 1)[..., None], Gc[..., None]], 1)
    Gc_joint = _conv_bn(Gc_joint, p["wggc"], p["bggc"])
    g_xc = jnp.mean(_conv_bn(xc, p["wgxc"], p["bgxc"]), axis=1, keepdims=True)
    yc = jnp.concatenate([g_xc, Gc_joint], 1)
    wyc = _conv_bn(_conv_bn(yc, p["wc1"], p["bc1"]), p["wc2"], p["bc2"], act=False)
    wyc = wyc.transpose(0, 2, 1, 3)                                  # (b, c, 1, 1)
    return jax.nn.sigmoid(wyc) * x


if __name__ == "__main__":
    # B*S = 256 -> BT = 2 (lane block 128), grid NB = 2 (pipelined / both v7x TCs busy)
    B, C, H, W = 4, 16, 8, 8
    S = H * W
    key = jax.random.PRNGKey(0)
    kx, kp = jax.random.split(key)
    x = jax.random.normal(kx, (B, C, H, W), jnp.float32)
    params = make_params(kp, C, S)

    ref = ref_forward(x, params)

    # strict structural check: f32 MXU operands must match the pure-JAX reference tightly
    out_f32 = jax.block_until_ready(rga_module(x, params, compute_dtype=jnp.float32))
    assert out_f32.shape == (B, C, H, W)
    err_f32 = float(jnp.max(jnp.abs(out_f32 - ref)))
    assert err_f32 < 2e-3, f"f32 kernel vs reference: max abs err {err_f32}"

    # perf path: bf16 operands on the wide matmuls, f32 per-batch Gram intermediates
    out_bf16 = jax.block_until_ready(rga_module(x, params, compute_dtype=jnp.bfloat16))
    assert out_bf16.shape == (B, C, H, W)
    assert bool(jnp.all(jnp.isfinite(out_bf16)))
    err_bf16 = float(jnp.max(jnp.abs(out_bf16 - ref)))
    assert err_bf16 < 0.35, f"bf16 kernel vs reference: max abs err {err_bf16}"

    print("KERNEL_OK")
</pallas_src>

<mosaic_0001>
module attributes {stable_mosaic.version = 11 : i64} {
  func.func @kernel(%arg0: i32, %arg1: memref<17x128xf32, #tpu.memory_space<vmem>>, %arg2: memref<24x17xf32, #tpu.memory_space<vmem>>, %arg3: memref<2x32x64xf32, #tpu.memory_space<vmem>>, %arg4: memref<16x32xf32, #tpu.memory_space<vmem>>, %arg5: memref<1x16xf32, #tpu.memory_space<vmem>>, %arg6: memref<96x64xf32, #tpu.memory_space<vmem>>, %arg7: memref<2x8x16xf32, #tpu.memory_space<vmem>>, %arg8: memref<4x8xf32, #tpu.memory_space<vmem>>, %arg9: memref<4x1xf32, #tpu.memory_space<vmem>>, %arg10: memref<96x7xf32, #tpu.memory_space<vmem>>, %arg11: memref<2xf32, #tpu.memory_space<smem>>, %arg12: memref<16x128xf32, #tpu.memory_space<vmem>>) attributes {dimension_semantics = [#tpu.dimension_semantics<parallel>], iteration_bounds = array<i64: 2>, scalar_prefetch = 0 : i64, scratch_operands = 0 : i64, tpu.core_type = #tpu.core_type<tc>, window_params = [{transform_indices = @transform_0, window_bounds = array<i64: 17, 128>}, {pipeline_mode = #tpu.pipeline_mode<synchronous>, transform_indices = @transform_1, window_bounds = array<i64: 24, 17>}, {pipeline_mode = #tpu.pipeline_mode<synchronous>, transform_indices = @transform_2, window_bounds = array<i64: 2, 32, 64>}, {pipeline_mode = #tpu.pipeline_mode<synchronous>, transform_indices = @transform_3, window_bounds = array<i64: 16, 32>}, {pipeline_mode = #tpu.pipeline_mode<synchronous>, transform_indices = @transform_4, window_bounds = array<i64: 1, 16>}, {pipeline_mode = #tpu.pipeline_mode<synchronous>, transform_indices = @transform_5, window_bounds = array<i64: 96, 64>}, {pipeline_mode = #tpu.pipeline_mode<synchronous>, transform_indices = @transform_6, window_bounds = array<i64: 2, 8, 16>}, {pipeline_mode = #tpu.pipeline_mode<synchronous>, transform_indices = @transform_7, window_bounds = array<i64: 4, 8>}, {pipeline_mode = #tpu.pipeline_mode<synchronous>, transform_indices = @transform_8, window_bounds = array<i64: 4, 1>}, {pipeline_mode = #tpu.pipeline_mode<synchronous>, transform_indices = @transform_9, window_bounds = array<i64: 96, 7>}, {transform_indices = @transform_10, window_bounds = array<i64: 2>}, {transform_indices = @transform_11, window_bounds = array<i64: 16, 128>}]} {
    %c0 = arith.constant 0 : index
    %c0_0 = arith.constant 0 : index
    %0 = vector.load %arg1[%c0, %c0_0] : memref<17x128xf32, #tpu.memory_space<vmem>>, vector<17x128xf32>
    %1 = vector.extract_strided_slice %0 {offsets = [0, 0], sizes = [16, 128], strides = [1, 1]} : vector<17x128xf32> to vector<16x128xf32>
    %c0_1 = arith.constant 0 : index
    %c0_2 = arith.constant 0 : index
    %2 = vector.load %arg10[%c0_1, %c0_2] : memref<96x7xf32, #tpu.memory_space<vmem>>, vector<96x7xf32>
    %3 = vector.extract_strided_slice %2 {offsets = [0, 0], sizes = [96, 1], strides = [1, 1]} : vector<96x7xf32> to vector<96x1xf32>
    %4 = vector.extract_strided_slice %2 {offsets = [0, 1], sizes = [32, 1], strides = [1, 1]} : vector<96x7xf32> to vector<32x1xf32>
    %5 = vector.extract_strided_slice %2 {offsets = [0, 2], sizes = [8, 1], strides = [1, 1]} : vector<96x7xf32> to vector<8x1xf32>
    %6 = vector.extract_strided_slice %2 {offsets = [0, 3], sizes = [16, 1], strides = [1, 1]} : vector<96x7xf32> to vector<16x1xf32>
    %7 = vector.extract_strided_slice %2 {offsets = [0, 4], sizes = [16, 1], strides = [1, 1]} : vector<96x7xf32> to vector<16x1xf32>
    %8 = vector.extract_strided_slice %2 {offsets = [0, 5], sizes = [4, 1], strides = [1, 1]} : vector<96x7xf32> to vector<4x1xf32>
    %9 = vector.extract_strided_slice %2 {offsets = [0, 6], sizes = [4, 1], strides = [1, 1]} : vector<96x7xf32> to vector<4x1xf32>
    %c0_3 = arith.constant 0 : index
    %10 = memref.load %arg11[%c0_3] : memref<2xf32, #tpu.memory_space<smem>>
    %c1 = arith.constant 1 : index
    %11 = memref.load %arg11[%c1] : memref<2xf32, #tpu.memory_space<smem>>
    %c0_4 = arith.constant 0 : index
    %c0_5 = arith.constant 0 : index
    %c0_6 = arith.constant 0 : index
    %12 = vector.load %arg3[%c0_4, %c0_5, %c0_6] : memref<2x32x64xf32, #tpu.memory_space<vmem>>, vector<1x32x64xf32>
    %13 = vector.shape_cast %12 : vector<1x32x64xf32> to vector<32x64xf32>
    %c1_7 = arith.constant 1 : index
    %c0_8 = arith.constant 0 : index
    %c0_9 = arith.constant 0 : index
    %14 = vector.load %arg3[%c1_7, %c0_8, %c0_9] : memref<2x32x64xf32, #tpu.memory_space<vmem>>, vector<1x32x64xf32>
    %15 = vector.shape_cast %14 : vector<1x32x64xf32> to vector<32x64xf32>
    %c0_10 = arith.constant 0 : index
    %c0_11 = arith.constant 0 : index
    %c0_12 = arith.constant 0 : index
    %16 = vector.load %arg7[%c0_10, %c0_11, %c0_12] : memref<2x8x16xf32, #tpu.memory_space<vmem>>, vector<1x8x16xf32>
    %17 = vector.shape_cast %16 : vector<1x8x16xf32> to vector<8x16xf32>
    %c1_13 = arith.constant 1 : index
    %c0_14 = arith.constant 0 : index
    %c0_15 = arith.constant 0 : index
    %18 = vector.load %arg7[%c1_13, %c0_14, %c0_15] : memref<2x8x16xf32, #tpu.memory_space<vmem>>, vector<1x8x16xf32>
    %19 = vector.shape_cast %18 : vector<1x8x16xf32> to vector<8x16xf32>
    %c0_16 = arith.constant 0 : index
    %c0_17 = arith.constant 0 : index
    %20 = vector.load %arg4[%c0_16, %c0_17] : memref<16x32xf32, #tpu.memory_space<vmem>>, vector<16x32xf32>
    %c0_18 = arith.constant 0 : index
    %c0_19 = arith.constant 0 : index
    %21 = vector.load %arg5[%c0_18, %c0_19] : memref<1x16xf32, #tpu.memory_space<vmem>>, vector<1x16xf32>
    %c0_20 = arith.constant 0 : index
    %c0_21 = arith.constant 0 : index
    %22 = vector.load %arg8[%c0_20, %c0_21] : memref<4x8xf32, #tpu.memory_space<vmem>>, vector<4x8xf32>
    %c0_22 = arith.constant 0 : index
    %c0_23 = arith.constant 0 : index
    %23 = vector.load %arg9[%c0_22, %c0_23] : memref<4x1xf32, #tpu.memory_space<vmem>>, vector<4x1xf32>
    %c0_24 = arith.constant 0 : index
    %c0_25 = arith.constant 0 : index
    %24 = vector.load %arg6[%c0_24, %c0_25] : memref<96x64xf32, #tpu.memory_space<vmem>>, vector<96x64xf32>
    %c0_26 = arith.constant 0 : index
    %c0_27 = arith.constant 0 : index
    %25 = vector.load %arg2[%c0_26, %c0_27] : memref<24x17xf32, #tpu.memory_space<vmem>>, vector<24x17xf32>
    %cst = arith.constant dense<0.000000e+00> : vector<24x128xf32>
    %26 = tpu.matmul %25, %0, %cst {dimension_numbers = #tpu.dot_dimension_numbers<[1], [0], [0], [1], [0, 0, 1, 1], [], []>} : vector<24x17xf32>, vector<17x128xf32>, vector<24x128xf32> -> vector<24x128xf32>
    %cst_28 = arith.constant 0.000000e+00 : f32
    %27 = vector.broadcast %cst_28 : f32 to vector<24x128xf32>
    %28 = arith.maximumf %26, %27 : vector<24x128xf32>
    %29 = vector.extract_strided_slice %28 {offsets = [0, 0], sizes = [8, 128], strides = [1, 1]} : vector<24x128xf32> to vector<8x128xf32>
    %30 = vector.extract_strided_slice %28 {offsets = [8, 0], sizes = [8, 128], strides = [1, 1]} : vector<24x128xf32> to vector<8x128xf32>
    %31 = vector.extract_strided_slice %28 {offsets = [16, 0], sizes = [8, 128], strides = [1, 1]} : vector<24x128xf32> to vector<8x128xf32>
    %cst_29 = arith.constant dense<0.000000e+00> : vector<128xf32>
    %32 = vector.multi_reduction <add>, %31, %cst_29 [0] : vector<8x128xf32> to vector<128xf32>
    %33 = vector.shape_cast %32 : vector<128xf32> to vector<1x128xf32>
    %cst_30 = arith.constant 8.000000e+00 : f32
    %34 = vector.broadcast %cst_30 : f32 to vector<1x128xf32>
    %35 = arith.divf %33, %34 : vector<1x128xf32>
    %36 = vector.extract_strided_slice %29 {offsets = [0, 0], sizes = [8, 64], strides = [1, 1]} : vector<8x128xf32> to vector<8x64xf32>
    %37 = vector.extract_strided_slice %30 {offsets = [0, 0], sizes = [8, 64], strides = [1, 1]} : vector<8x128xf32> to vector<8x64xf32>
    %cst_31 = arith.constant dense<0.000000e+00> : vector<32x8xf32>
    %38 = tpu.matmul %13, %37, %cst_31 {dimension_numbers = #tpu.dot_dimension_numbers<[1], [1], [0], [0], [0, 0, 1, 0], [], []>} : vector<32x64xf32>, vector<8x64xf32>, vector<32x8xf32> -> vector<32x8xf32>
    %cst_32 = arith.constant dense<0.000000e+00> : vector<32x8xf32>
    %39 = tpu.matmul %15, %36, %cst_32 {dimension_numbers = #tpu.dot_dimension_numbers<[1], [1], [0], [0], [0, 0, 1, 0], [], []>} : vector<32x64xf32>, vector<8x64xf32>, vector<32x8xf32> -> vector<32x8xf32>
    %cst_33 = arith.constant dense<0.000000e+00> : vector<32x64xf32>
    %40 = tpu.matmul %38, %36, %cst_33 {dimension_numbers = #tpu.dot_dimension_numbers<[1], [0], [0], [1], [0, 0, 1, 1], [], []>} : vector<32x8xf32>, vector<8x64xf32>, vector<32x64xf32> -> vector<32x64xf32>
    %cst_34 = arith.constant dense<0.000000e+00> : vector<32x64xf32>
    %41 = tpu.matmul %39, %37, %cst_34 {dimension_numbers = #tpu.dot_dimension_numbers<[1], [0], [0], [1], [0, 0, 1, 1], [], []>} : vector<32x8xf32>, vector<8x64xf32>, vector<32x64xf32> -> vector<32x64xf32>
    %42 = arith.addf %40, %41 : vector<32x64xf32>
    %43 = vector.extract_strided_slice %29 {offsets = [0, 64], sizes = [8, 64], strides = [1, 1]} : vector<8x128xf32> to vector<8x64xf32>
    %44 = vector.extract_strided_slice %30 {offsets = [0, 64], sizes = [8, 64], strides = [1, 1]} : vector<8x128xf32> to vector<8x64xf32>
    %cst_35 = arith.constant dense<0.000000e+00> : vector<32x8xf32>
    %45 = tpu.matmul %13, %44, %cst_35 {dimension_numbers = #tpu.dot_dimension_numbers<[1], [1], [0], [0], [0, 0, 1, 0], [], []>} : vector<32x64xf32>, vector<8x64xf32>, vector<32x8xf32> -> vector<32x8xf32>
    %cst_36 = arith.constant dense<0.000000e+00> : vector<32x8xf32>
    %46 = tpu.matmul %15, %43, %cst_36 {dimension_numbers = #tpu.dot_dimension_numbers<[1], [1], [0], [0], [0, 0, 1, 0], [], []>} : vector<32x64xf32>, vector<8x64xf32>, vector<32x8xf32> -> vector<32x8xf32>
    %cst_37 = arith.constant dense<0.000000e+00> : vector<32x64xf32>
    %47 = tpu.matmul %45, %43, %cst_37 {dimension_numbers = #tpu.dot_dimension_numbers<[1], [0], [0], [1], [0, 0, 1, 1], [], []>} : vector<32x8xf32>, vector<8x64xf32>, vector<32x64xf32> -> vector<32x64xf32>
    %cst_38 = arith.constant dense<0.000000e+00> : vector<32x64xf32>
    %48 = tpu.matmul %46, %44, %cst_38 {dimension_numbers = #tpu.dot_dimension_numbers<[1], [0], [0], [1], [0, 0, 1, 1], [], []>} : vector<32x8xf32>, vector<8x64xf32>, vector<32x64xf32> -> vector<32x64xf32>
    %49 = arith.addf %47, %48 : vector<32x64xf32>
    %50 = tpu.concatenate %42, %49 in 1 : vector<32x64xf32>, vector<32x64xf32> -> vector<32x128xf32>
    %51 = vector.broadcast %4 : vector<32x1xf32> to vector<32x128xf32>
    %52 = arith.addf %50, %51 : vector<32x128xf32>
    %cst_39 = arith.constant 0.000000e+00 : f32
    %53 = vector.broadcast %cst_39 : f32 to vector<32x128xf32>
    %54 = arith.maximumf %52, %53 : vector<32x128xf32>
    %55 = vector.broadcast %6 : vector<16x1xf32> to vector<16x128xf32>
    %56 = vector.broadcast %35 : vector<1x128xf32> to vector<16x128xf32>
    %57 = arith.mulf %55, %56 : vector<16x128xf32>
    %cst_40 = arith.constant dense<0.000000e+00> : vector<16x128xf32>
    %58 = tpu.matmul %20, %54, %cst_40 {dimension_numbers = #tpu.dot_dimension_numbers<[1], [0], [0], [1], [0, 0, 1, 1], [], []>} : vector<16x32xf32>, vector<32x128xf32>, vector<16x128xf32> -> vector<16x128xf32>
    %59 = arith.addf %57, %58 : vector<16x128xf32>
    %60 = vector.broadcast %7 : vector<16x1xf32> to vector<16x128xf32>
    %61 = arith.addf %59, %60 : vector<16x128xf32>
    %cst_41 = arith.constant 0.000000e+00 : f32
    %62 = vector.broadcast %cst_41 : f32 to vector<16x128xf32>
    %63 = arith.maximumf %61, %62 : vector<16x128xf32>
    %cst_42 = arith.constant dense<0.000000e+00> : vector<1x128xf32>
    %64 = tpu.matmul %21, %63, %cst_42 {dimension_numbers = #tpu.dot_dimension_numbers<[1], [0], [0], [1], [0, 0, 1, 1], [], []>} : vector<1x16xf32>, vector<16x128xf32>, vector<1x128xf32> -> vector<1x128xf32>
    %65 = vector.broadcast %10 : f32 to vector<1x128xf32>
    %66 = arith.addf %64, %65 : vector<1x128xf32>
    %67 = arith.negf %66 : vector<1x128xf32>
    %68 = math.exp %67 : vector<1x128xf32>
    %cst_43 = arith.constant 1.000000e+00 : f32
    %69 = vector.broadcast %cst_43 : f32 to vector<1x128xf32>
    %70 = arith.addf %69, %68 : vector<1x128xf32>
    %71 = arith.divf %69, %70 : vector<1x128xf32>
    %72 = vector.broadcast %71 : vector<1x128xf32> to vector<16x128xf32>
    %73 = arith.mulf %72, %1 : vector<16x128xf32>
    %74 = vector.shape_cast %3 : vector<96x1xf32> to vector<96x1xf32>
    %75 = vector.broadcast %74 : vector<96x1xf32> to vector<96x16xf32>
    %76 = vector.shape_cast %5 : vector<8x1xf32> to vector<8x1xf32>
    %77 = vector.broadcast %76 : vector<8x1xf32> to vector<8x16xf32>
    %78 = vector.shape_cast %8 : vector<4x1xf32> to vector<4x1xf32>
    %79 = vector.broadcast %78 : vector<4x1xf32> to vector<4x16xf32>
    %80 = vector.shape_cast %9 : vector<4x1xf32> to vector<4x1xf32>
    %81 = vector.broadcast %80 : vector<4x1xf32> to vector<4x16xf32>
    %82 = vector.extract_strided_slice %73 {offsets = [0, 0], sizes = [16, 64], strides = [1, 1]} : vector<16x128xf32> to vector<16x64xf32>
    %cst_44 = arith.constant dense<0.000000e+00> : vector<96x16xf32>
    %83 = tpu.matmul %24, %82, %cst_44 {dimension_numbers = #tpu.dot_dimension_numbers<[1], [1], [0], [0], [0, 0, 1, 0], [], []>} : vector<96x64xf32>, vector<16x64xf32>, vector<96x16xf32> -> vector<96x16xf32>
    %84 = arith.addf %83, %75 : vector<96x16xf32>
    %cst_45 = arith.constant 0.000000e+00 : f32
    %85 = vector.broadcast %cst_45 : f32 to vector<96x16xf32>
    %86 = arith.maximumf %84, %85 : vector<96x16xf32>
    %87 = vector.extract_strided_slice %86 {offsets = [0, 0], sizes = [32, 16], strides = [1, 1]} : vector<96x16xf32> to vector<32x16xf32>
    %88 = vector.extract_strided_slice %86 {offsets = [32, 0], sizes = [32, 16], strides = [1, 1]} : vector<96x16xf32> to vector<32x16xf32>
    %89 = vector.extract_strided_slice %86 {offsets = [64, 0], sizes = [32, 16], strides = [1, 1]} : vector<96x16xf32> to vector<32x16xf32>
    %cst_46 = arith.constant dense<0.000000e+00> : vector<16xf32>
    %90 = vector.multi_reduction <add>, %89, %cst_46 [0] : vector<32x16xf32> to vector<16xf32>
    %91 = vector.shape_cast %90 : vector<16xf32> to vector<1x16xf32>
    %cst_47 = arith.constant 3.200000e+01 : f32
    %92 = vector.broadcast %cst_47 : f32 to vector<1x16xf32>
    %93 = arith.divf %91, %92 : vector<1x16xf32>
    %cst_48 = arith.constant dense<0.000000e+00> : vector<16x16xf32>
    %94 = tpu.matmul %87, %88, %cst_48 {dimension_numbers = #tpu.dot_dimension_numbers<[0], [0], [1], [1], [0, 1, 1, 1], [], []>} : vector<32x16xf32>, vector<32x16xf32>, vector<16x16xf32> -> vector<16x16xf32>
    %cst_49 = arith.constant dense<0.000000e+00> : vector<8x16xf32>
    %95 = tpu.matmul %17, %94, %cst_49 {dimension_numbers = #tpu.dot_dimension_numbers<[1], [1], [0], [0], [0, 0, 1, 0], [], []>} : vector<8x16xf32>, vector<16x16xf32>, vector<8x16xf32> -> vector<8x16xf32>
    %cst_50 = arith.constant dense<0.000000e+00> : vector<8x16xf32>
    %96 = tpu.matmul %19, %94, %cst_50 {dimension_numbers = #tpu.dot_dimension_numbers<[1], [0], [0], [1], [0, 0, 1, 1], [], []>} : vector<8x16xf32>, vector<16x16xf32>, vector<8x16xf32> -> vector<8x16xf32>
    %97 = arith.addf %95, %96 : vector<8x16xf32>
    %98 = arith.addf %97, %77 : vector<8x16xf32>
    %cst_51 = arith.constant 0.000000e+00 : f32
    %99 = vector.broadcast %cst_51 : f32 to vector<8x16xf32>
    %100 = arith.maximumf %98, %99 : vector<8x16xf32>
    %101 = vector.broadcast %93 : vector<1x16xf32> to vector<4x16xf32>
    %102 = arith.mulf %79, %101 : vector<4x16xf32>
    %cst_52 = arith.constant dense<0.000000e+00> : vector<4x16xf32>
    %103 = tpu.matmul %22, %100, %cst_52 {dimension_numbers = #tpu.dot_dimension_numbers<[1], [0], [0], [1], [0, 0, 1, 1], [], []>} : vector<4x8xf32>, vector<8x16xf32>, vector<4x16xf32> -> vector<4x16xf32>
    %104 = arith.addf %102, %103 : vector<4x16xf32>
    %105 = arith.addf %104, %81 : vector<4x16xf32>
    %cst_53 = arith.constant 0.000000e+00 : f32
    %106 = vector.broadcast %cst_53 : f32 to vector<4x16xf32>
    %107 = arith.maximumf %105, %106 : vector<4x16xf32>
    %cst_54 = arith.constant dense<0.000000e+00> : vector<16x1xf32>
    %108 = tpu.matmul %107, %23, %cst_54 {dimension_numbers = #tpu.dot_dimension_numbers<[0], [0], [1], [1], [0, 1, 1, 1], [], []>} : vector<4x16xf32>, vector<4x1xf32>, vector<16x1xf32> -> vector<16x1xf32>
    %109 = vector.broadcast %11 : f32 to vector<16x1xf32>
    %110 = arith.addf %108, %109 : vector<16x1xf32>
    %111 = arith.negf %110 : vector<16x1xf32>
    %112 = math.exp %111 : vector<16x1xf32>
    %cst_55 = arith.constant 1.000000e+00 : f32
    %113 = vector.broadcast %cst_55 : f32 to vector<16x1xf32>
    %114 = arith.addf %113, %112 : vector<16x1xf32>
    %115 = arith.divf %113, %114 : vector<16x1xf32>
    %116 = vector.extract_strided_slice %73 {offsets = [0, 0], sizes = [16, 64], strides = [1, 1]} : vector<16x128xf32> to vector<16x64xf32>
    %117 = vector.broadcast %115 : vector<16x1xf32> to vector<16x64xf32>
    %118 = arith.mulf %117, %116 : vector<16x64xf32>
    %119 = vector.extract_strided_slice %73 {offsets = [0, 64], sizes = [16, 64], strides = [1, 1]} : vector<16x128xf32> to vector<16x64xf32>
    %cst_56 = arith.constant dense<0.000000e+00> : vector<96x16xf32>
    %120 = tpu.matmul %24, %119, %cst_56 {dimension_numbers = #tpu.dot_dimension_numbers<[1], [1], [0], [0], [0, 0, 1, 0], [], []>} : vector<96x64xf32>, vector<16x64xf32>, vector<96x16xf32> -> vector<96x16xf32>
    %121 = arith.addf %120, %75 : vector<96x16xf32>
    %cst_57 = arith.constant 0.000000e+00 : f32
    %122 = vector.broadcast %cst_57 : f32 to vector<96x16xf32>
    %123 = arith.maximumf %121, %122 : vector<96x16xf32>
    %124 = vector.extract_strided_slice %123 {offsets = [0, 0], sizes = [32, 16], strides = [1, 1]} : vector<96x16xf32> to vector<32x16xf32>
    %125 = vector.extract_strided_slice %123 {offsets = [32, 0], sizes = [32, 16], strides = [1, 1]} : vector<96x16xf32> to vector<32x16xf32>
    %126 = vector.extract_strided_slice %123 {offsets = [64, 0], sizes = [32, 16], strides = [1, 1]} : vector<96x16xf32> to vector<32x16xf32>
    %cst_58 = arith.constant dense<0.000000e+00> : vector<16xf32>
    %127 = vector.multi_reduction <add>, %126, %cst_58 [0] : vector<32x16xf32> to vector<16xf32>
    %128 = vector.shape_cast %127 : vector<16xf32> to vector<1x16xf32>
    %cst_59 = arith.constant 3.200000e+01 : f32
    %129 = vector.broadcast %cst_59 : f32 to vector<1x16xf32>
    %130 = arith.divf %128, %129 : vector<1x16xf32>
    %cst_60 = arith.constant dense<0.000000e+00> : vector<16x16xf32>
    %131 = tpu.matmul %124, %125, %cst_60 {dimension_numbers = #tpu.dot_dimension_numbers<[0], [0], [1], [1], [0, 1, 1, 1], [], []>} : vector<32x16xf32>, vector<32x16xf32>, vector<16x16xf32> -> vector<16x16xf32>
    %cst_61 = arith.constant dense<0.000000e+00> : vector<8x16xf32>
    %132 = tpu.matmul %17, %131, %cst_61 {dimension_numbers = #tpu.dot_dimension_numbers<[1], [1], [0], [0], [0, 0, 1, 0], [], []>} : vector<8x16xf32>, vector<16x16xf32>, vector<8x16xf32> -> vector<8x16xf32>
    %cst_62 = arith.constant dense<0.000000e+00> : vector<8x16xf32>
    %133 = tpu.matmul %19, %131, %cst_62 {dimension_numbers = #tpu.dot_dimension_numbers<[1], [0], [0], [1], [0, 0, 1, 1], [], []>} : vector<8x16xf32>, vector<16x16xf32>, vector<8x16xf32> -> vector<8x16xf32>
    %134 = arith.addf %132, %133 : vector<8x16xf32>
    %135 = arith.addf %134, %77 : vector<8x16xf32>
    %cst_63 = arith.constant 0.000000e+00 : f32
    %136 = vector.broadcast %cst_63 : f32 to vector<8x16xf32>
    %137 = arith.maximumf %135, %136 : vector<8x16xf32>
    %138 = vector.broadcast %130 : vector<1x16xf32> to vector<4x16xf32>
    %139 = arith.mulf %79, %138 : vector<4x16xf32>
    %cst_64 = arith.constant dense<0.000000e+00> : vector<4x16xf32>
    %140 = tpu.matmul %22, %137, %cst_64 {dimension_numbers = #tpu.dot_dimension_numbers<[1], [0], [0], [1], [0, 0, 1, 1], [], []>} : vector<4x8xf32>, vector<8x16xf32>, vector<4x16xf32> -> vector<4x16xf32>
    %141 = arith.addf %139, %140 : vector<4x16xf32>
    %142 = arith.addf %141, %81 : vector<4x16xf32>
    %cst_65 = arith.constant 0.000000e+00 : f32
    %143 = vector.broadcast %cst_65 : f32 to vector<4x16xf32>
    %144 = arith.maximumf %142, %143 : vector<4x16xf32>
    %cst_66 = arith.constant dense<0.000000e+00> : vector<16x1xf32>
    %145 = tpu.matmul %144, %23, %cst_66 {dimension_numbers = #tpu.dot_dimension_numbers<[0], [0], [1], [1], [0, 1, 1, 1], [], []>} : vector<4x16xf32>, vector<4x1xf32>, vector<16x1xf32> -> vector<16x1xf32>
    %146 = vector.broadcast %11 : f32 to vector<16x1xf32>
    %147 = arith.addf %145, %146 : vector<16x1xf32>
    %148 = arith.negf %147 : vector<16x1xf32>
    %149 = math.exp %148 : vector<16x1xf32>
    %cst_67 = arith.constant 1.000000e+00 : f32
    %150 = vector.broadcast %cst_67 : f32 to vector<16x1xf32>
    %151 = arith.addf %150, %149 : vector<16x1xf32>
    %152 = arith.divf %150, %151 : vector<16x1xf32>
    %153 = vector.extract_strided_slice %73 {offsets = [0, 64], sizes = [16, 64], strides = [1, 1]} : vector<16x128xf32> to vector<16x64xf32>
    %154 = vector.broadcast %152 : vector<16x1xf32> to vector<16x64xf32>
    %155 = arith.mulf %154, %153 : vector<16x64xf32>
    %156 = tpu.concatenate %118, %155 in 1 : vector<16x64xf32>, vector<16x64xf32> -> vector<16x128xf32>
    %c0_68 = arith.constant 0 : index
    %c0_69 = arith.constant 0 : index
    %157 = vector.load %arg12[%c0_68, %c0_69] : memref<16x128xf32, #tpu.memory_space<vmem>>, vector<16x128xf32>
    tpu.vector_store %arg12[%c0_68, %c0_69], %156 {strides = array<i32>} : memref<16x128xf32, #tpu.memory_space<vmem>>, vector<16x128xf32>,
    return
  }
  func.func @transform_0(%arg0: i32) -> (i32, i32) {
    %c0_i32 = arith.constant 0 : i32
    %c0_i32_0 = arith.constant 0 : i32
    return %c0_i32, %arg0 : i32, i32
  }
  func.func @transform_1(%arg0: i32) -> (i32, i32) {
    %c0_i32 = arith.constant 0 : i32
    %c0_i32_0 = arith.constant 0 : i32
    %c0_i32_1 = arith.constant 0 : i32
    return %c0_i32, %c0_i32_0 : i32, i32
  }
  func.func @transform_2(%arg0: i32) -> (i32, i32, i32) {
    %c0_i32 = arith.constant 0 : i32
    %c0_i32_0 = arith.constant 0 : i32
    %c0_i32_1 = arith.constant 0 : i32
    %c0_i32_2 = arith.constant 0 : i32
    return %c0_i32, %c0_i32_0, %c0_i32_1 : i32, i32, i32
  }
  func.func @transform_3(%arg0: i32) -> (i32, i32) {
    %c0_i32 = arith.constant 0 : i32
    %c0_i32_0 = arith.constant 0 : i32
    %c0_i32_1 = arith.constant 0 : i32
    return %c0_i32, %c0_i32_0 : i32, i32
  }
  func.func @transform_4(%arg0: i32) -> (i32, i32) {
    %c0_i32 = arith.constant 0 : i32
    %c0_i32_0 = arith.constant 0 : i32
    %c0_i32_1 = arith.constant 0 : i32
    return %c0_i32, %c0_i32_0 : i32, i32
  }
  func.func @transform_5(%arg0: i32) -> (i32, i32) {
    %c0_i32 = arith.constant 0 : i32
    %c0_i32_0 = arith.constant 0 : i32
    %c0_i32_1 = arith.constant 0 : i32
    return %c0_i32, %c0_i32_0 : i32, i32
  }
  func.func @transform_6(%arg0: i32) -> (i32, i32, i32) {
    %c0_i32 = arith.constant 0 : i32
    %c0_i32_0 = arith.constant 0 : i32
    %c0_i32_1 = arith.constant 0 : i32
    %c0_i32_2 = arith.constant 0 : i32
    return %c0_i32, %c0_i32_0, %c0_i32_1 : i32, i32, i32
  }
  func.func @transform_7(%arg0: i32) -> (i32, i32) {
    %c0_i32 = arith.constant 0 : i32
    %c0_i32_0 = arith.constant 0 : i32
    %c0_i32_1 = arith.constant 0 : i32
    return %c0_i32, %c0_i32_0 : i32, i32
  }
  func.func @transform_8(%arg0: i32) -> (i32, i32) {
    %c0_i32 = arith.constant 0 : i32
    %c0_i32_0 = arith.constant 0 : i32
    %c0_i32_1 = arith.constant 0 : i32
    return %c0_i32, %c0_i32_0 : i32, i32
  }
  func.func @transform_9(%arg0: i32) -> (i32, i32) {
    %c0_i32 = arith.constant 0 : i32
    %c0_i32_0 = arith.constant 0 : i32
    %c0_i32_1 = arith.constant 0 : i32
    return %c0_i32, %c0_i32_0 : i32, i32
  }
  func.func @transform_10(%arg0: i32) -> i32 {
    %c0_i32 = arith.constant 0 : i32
    %c0_i32_0 = arith.constant 0 : i32
    return %c0_i32 : i32
  }
  func.func @transform_11(%arg0: i32) -> (i32, i32) {
    %c0_i32 = arith.constant 0 : i32
    %c0_i32_0 = arith.constant 0 : i32
    return %c0_i32, %arg0 : i32, i32
  }
}

</mosaic_0001>

<llo_original>
// kernel: tpu_custom_call.1
$region0: #{tpu_custom_call.1}
  #allocation0 [shape = 'u32[]', space=smem, size = 0x4, offset = 0x4, fixed_abs, tag = 'smem constant byte address 0x4 - core index']
  #allocation1 [shape = 'u32[72,128]{1,0:T(1,128)}', space=vmem, size = 0x9000, scoped, tag = 'internal scratch']
  %s0 = inlined_call_operand.vmem [shape: f32[17,256], index: 0, kind: input, shape index: {}]
  %s1 = inlined_call_operand.vmem [shape: f32[24,17], index: 1, kind: input, shape index: {}]
  %s2 = inlined_call_operand.vmem [shape: f32[2,32,64], index: 2, kind: input, shape index: {}]
  %s3 = inlined_call_operand.vmem [shape: f32[16,32], index: 3, kind: input, shape index: {}]
  %s4 = inlined_call_operand.vmem [shape: f32[1,16], index: 4, kind: input, shape index: {}]
  %s5 = inlined_call_operand.vmem [shape: f32[96,64], index: 5, kind: input, shape index: {}]
  %s6 = inlined_call_operand.vmem [shape: f32[2,8,16], index: 6, kind: input, shape index: {}]
  %s7 = inlined_call_operand.vmem [shape: f32[4,8], index: 7, kind: input, shape index: {}]
  %s8 = inlined_call_operand.vmem [shape: f32[4,1], index: 8, kind: input, shape index: {}]
  %s9 = inlined_call_operand.vmem [shape: f32[96,7], index: 9, kind: input, shape index: {}]
  %s10 = inlined_call_operand.vmem [shape: f32[2], index: 10, kind: input, shape index: {}]
  %s11 = inlined_call_operand.hbm [shape: f32[16,256], index: 11, kind: output, shape index: {}]
  %s12 = sld [smem:[#allocation0]]
  $region119: #{tpu_custom_call.1} parent=0
    _
  %s14 = ssub.s32 1, %s12
  %s15 = scalar_select 0, %s14, %s12
  $region1: #{tpu_custom_call.1} parent=0
    #allocation2 [shape = 'u8[24576]{0}', space=vmem, size = 0x6000, scoped, tag = 'input window, operand 0']
    #allocation3 [shape = 'u8[512]{0}', space=smem, size = 0x200, scoped, tag = 'input window, operand 10, single buffered']
    #allocation4 [shape = 's32[2]{0}', space=sflag, size = 0x8, scoped, tag = 'scoped memory for tpu_custom_call.1']
    #allocation5 [shape = 's32[2]{0}', space=sflag, size = 0x8, scoped, tag = 'scoped memory for tpu_custom_call.1']
    #allocation6 [shape = 'u8[16384]{0}', space=vmem, size = 0x4000, scoped, tag = 'output window, operand 0']
    %16 = vsyncpa [#allocation5], 0
    %17 = vsyncpa [#allocation4], 0
    %s18 = scalar_lea.sflag [#allocation4], 1
    %19 = vsyncpa %s18, 0
    loop: start=0, step=1, limit=4
    $region2: #{tpu_custom_call.1} parent=1 // loop_pre_header
      _
    $region3: #{tpu_custom_call.1} parent=1 // loop_header
      %s21 = sphi 0, %s25
      %p22 = scmp.ge.s32.totalorder %s21, 4
      %s31 = sphi 0, %s33
      %s34 = sphi 0, %s31
      %s35 = sphi 0, %s34
      %s51 = sphi 0, %s35
      %s55 = sphi 0, %s55
      %s57 = sphi 0, %s55
      %s58 = sphi 0, %s57
      %s72 = sphi 0, %s58
      %s76 = sphi 0, %s76
      %s78 = sphi 0, %s76
      %s79 = sphi 0, %s78
      %s93 = sphi 0, %s79
      %s97 = sphi 0, %s97
      %s99 = sphi 0, %s97
      %s100 = sphi 0, %s99
      %s114 = sphi 0, %s100
      %s118 = sphi 0, %s118
      %s120 = sphi 0, %s118
      %s121 = sphi 0, %s120
      %s135 = sphi 0, %s121
      %s139 = sphi 0, %s139
      %s141 = sphi 0, %s139
      %s142 = sphi 0, %s141
      %s156 = sphi 0, %s142
      %s160 = sphi 0, %s160
      %s162 = sphi 0, %s160
      %s163 = sphi 0, %s162
      %s177 = sphi 0, %s163
      %s181 = sphi 0, %s181
      %s183 = sphi 0, %s181
      %s184 = sphi 0, %s183
      %s198 = sphi 0, %s184
      %s202 = sphi 0, %s202
      %s204 = sphi 0, %s202
      %s205 = sphi 0, %s204
      %s219 = sphi 0, %s205
      %s223 = sphi 0, %s223
      %s225 = sphi 0, %s223
      %s226 = sphi 0, %s225
      %s240 = sphi 0, %s226
      %s244 = sphi 0, %s244
      %s246 = sphi 0, %s244
      %s247 = sphi 0, %s246
      %s261 = sphi 0, %s247
      %s267 = sphi 0, %s269
      %s270 = sphi 0, %s267
      %s271 = sphi 0, %s270
      %s287 = sphi 0, %s271
    $region4: #{tpu_custom_call.1} parent=1 // loop_header_branch
      %24 = sbr.rel (%p22) target = $region8
    $region5: #{tpu_custom_call.1} parent=1 // loop_body
      %s26 = ssub.s32 %s21, 1
      %s27 = ssub.s32 %s21, 2
      %s28 = sadd.s32 %s21, 1
      %s29 = ssub.s32 %s21, %s28
      %p30 = scmp.eq.s32.totalorder %s29, 0
      %s32 = sadd.s32 %s31, 1
      %s33 = scalar_select %p30, %s31, %s32
      %p36 = pneg %p30
      %p37 = scmp.eq.s32.totalorder %s21, 1
      %p38 = por %p36, %p37
      %p39 = scmp.ne.s32.totalorder %s31, %s34
      %p40 = scmp.eq.s32.totalorder %s21, 0
      %p41 = por %p39, %p40
      %p42 = scmp.ne.s32.totalorder %s31, %s34
      %p43 = scmp.eq.s32.totalorder %s26, 1
      %p44 = por %p42, %p43
      %p45 = scmp.ne.s32.totalorder %s34, %s35
      %p46 = scmp.eq.s32.totalorder %s26, 0
      %p47 = por %p45, %p46
      %p48 = scmp.ne.s32.totalorder %s34, %s35
      %p49 = scmp.eq.s32.totalorder %s27, 1
      %p50 = por %p48, %p49
      %p52 = scmp.ne.s32.totalorder %s35, %s51
      %p53 = scmp.eq.s32.totalorder %s27, 0
      %p54 = por %p52, %p53
      %s56 = sadd.s32 %s55, 1
      %p59 = scmp.eq.s32.totalorder %s21, 1
      %p60 = scmp.ne.s32.totalorder %s55, %s57
      %p61 = scmp.eq.s32.totalorder %s21, 0
      %p62 = por %p60, %p61
      %p63 = scmp.ne.s32.totalorder %s55, %s57
      %p64 = scmp.eq.s32.totalorder %s26, 1
      %p65 = por %p63, %p64
      %p66 = scmp.ne.s32.totalorder %s57, %s58
      %p67 = scmp.eq.s32.totalorder %s26, 0
      %p68 = por %p66, %p67
      %p69 = scmp.ne.s32.totalorder %s57, %s58
      %p70 = scmp.eq.s32.totalorder %s27, 1
      %p71 = por %p69, %p70
      %p73 = scmp.ne.s32.totalorder %s58, %s72
      %p74 = scmp.eq.s32.totalorder %s27, 0
      %p75 = por %p73, %p74
      %s77 = sadd.s32 %s76, 1
      %p80 = scmp.eq.s32.totalorder %s21, 1
      %p81 = scmp.ne.s32.totalorder %s76, %s78
      %p82 = scmp.eq.s32.totalorder %s21, 0
      %p83 = por %p81, %p82
      %p84 = scmp.ne.s32.totalorder %s76, %s78
      %p85 = scmp.eq.s32.totalorder %s26, 1
      %p86 = por %p84, %p85
      %p87 = scmp.ne.s32.totalorder %s78, %s79
      %p88 = scmp.eq.s32.totalorder %s26, 0
      %p89 = por %p87, %p88
      %p90 = scmp.ne.s32.totalorder %s78, %s79
      %p91 = scmp.eq.s32.totalorder %s27, 1
      %p92 = por %p90, %p91
      %p94 = scmp.ne.s32.totalorder %s79, %s93
      %p95 = scmp.eq.s32.totalorder %s27, 0
      %p96 = por %p94, %p95
      %s98 = sadd.s32 %s97, 1
      %p101 = scmp.eq.s32.totalorder %s21, 1
      %p102 = scmp.ne.s32.totalorder %s97, %s99
      %p103 = scmp.eq.s32.totalorder %s21, 0
      %p104 = por %p102, %p103
      %p105 = scmp.ne.s32.totalorder %s97, %s99
      %p106 = scmp.eq.s32.totalorder %s26, 1
      %p107 = por %p105, %p106
      %p108 = scmp.ne.s32.totalorder %s99, %s100
      %p109 = scmp.eq.s32.totalorder %s26, 0
      %p110 = por %p108, %p109
      %p111 = scmp.ne.s32.totalorder %s99, %s100
      %p112 = scmp.eq.s32.totalorder %s27, 1
      %p113 = por %p111, %p112
      %p115 = scmp.ne.s32.totalorder %s100, %s114
      %p116 = scmp.eq.s32.totalorder %s27, 0
      %p117 = por %p115, %p116
      %s119 = sadd.s32 %s118, 1
      %p122 = scmp.eq.s32.totalorder %s21, 1
      %p123 = scmp.ne.s32.totalorder %s118, %s120
      %p124 = scmp.eq.s32.totalorder %s21, 0
      %p125 = por %p123, %p124
      %p126 = scmp.ne.s32.totalorder %s118, %s120
      %p127 = scmp.eq.s32.totalorder %s26, 1
      %p128 = por %p126, %p127
      %p129 = scmp.ne.s32.totalorder %s120, %s121
      %p130 = scmp.eq.s32.totalorder %s26, 0
      %p131 = por %p129, %p130
      %p132 = scmp.ne.s32.totalorder %s120, %s121
      %p133 = scmp.eq.s32.totalorder %s27, 1
      %p134 = por %p132, %p133
      %p136 = scmp.ne.s32.totalorder %s121, %s135
      %p137 = scmp.eq.s32.totalorder %s27, 0
      %p138 = por %p136, %p137
      %s140 = sadd.s32 %s139, 1
      %p143 = scmp.eq.s32.totalorder %s21, 1
      %p144 = scmp.ne.s32.totalorder %s139, %s141
      %p145 = scmp.eq.s32.totalorder %s21, 0
      %p146 = por %p144, %p145
      %p147 = scmp.ne.s32.totalorder %s139, %s141
      %p148 = scmp.eq.s32.totalorder %s26, 1
      %p149 = por %p147, %p148
      %p150 = scmp.ne.s32.totalorder %s141, %s142
      %p151 = scmp.eq.s32.totalorder %s26, 0
      %p152 = por %p150, %p151
      %p153 = scmp.ne.s32.totalorder %s141, %s142
      %p154 = scmp.eq.s32.totalorder %s27, 1
      %p155 = por %p153, %p154
      %p157 = scmp.ne.s32.totalorder %s142, %s156
      %p158 = scmp.eq.s32.totalorder %s27, 0
      %p159 = por %p157, %p158
      %s161 = sadd.s32 %s160, 1
      %p164 = scmp.eq.s32.totalorder %s21, 1
      %p165 = scmp.ne.s32.totalorder %s160, %s162
      %p166 = scmp.eq.s32.totalorder %s21, 0
      %p167 = por %p165, %p166
      %p168 = scmp.ne.s32.totalorder %s160, %s162
      %p169 = scmp.eq.s32.totalorder %s26, 1
      %p170 = por %p168, %p169
      %p171 = scmp.ne.s32.totalorder %s162, %s163
      %p172 = scmp.eq.s32.totalorder %s26, 0
      %p173 = por %p171, %p172
      %p174 = scmp.ne.s32.totalorder %s162, %s163
      %p175 = scmp.eq.s32.totalorder %s27, 1
      %p176 = por %p174, %p175
      %p178 = scmp.ne.s32.totalorder %s163, %s177
      %p179 = scmp.eq.s32.totalorder %s27, 0
      %p180 = por %p178, %p179
      %s182 = sadd.s32 %s181, 1
      %p185 = scmp.eq.s32.totalorder %s21, 1
      %p186 = scmp.ne.s32.totalorder %s181, %s183
      %p187 = scmp.eq.s32.totalorder %s21, 0
      %p188 = por %p186, %p187
      %p189 = scmp.ne.s32.totalorder %s181, %s183
      %p190 = scmp.eq.s32.totalorder %s26, 1
      %p191 = por %p189, %p190
      %p192 = scmp.ne.s32.totalorder %s183, %s184
      %p193 = scmp.eq.s32.totalorder %s26, 0
      %p194 = por %p192, %p193
      %p195 = scmp.ne.s32.totalorder %s183, %s184
      %p196 = scmp.eq.s32.totalorder %s27, 1
      %p197 = por %p195, %p196
      %p199 = scmp.ne.s32.totalorder %s184, %s198
      %p200 = scmp.eq.s32.totalorder %s27, 0
      %p201 = por %p199, %p200
      %s203 = sadd.s32 %s202, 1
      %p206 = scmp.eq.s32.totalorder %s21, 1
      %p207 = scmp.ne.s32.totalorder %s202, %s204
      %p208 = scmp.eq.s32.totalorder %s21, 0
      %p209 = por %p207, %p208
      %p210 = scmp.ne.s32.totalorder %s202, %s204
      %p211 = scmp.eq.s32.totalorder %s26, 1
      %p212 = por %p210, %p211
      %p213 = scmp.ne.s32.totalorder %s204, %s205
      %p214 = scmp.eq.s32.totalorder %s26, 0
      %p215 = por %p213, %p214
      %p216 = scmp.ne.s32.totalorder %s204, %s205
      %p217 = scmp.eq.s32.totalorder %s27, 1
      %p218 = por %p216, %p217
      %p220 = scmp.ne.s32.totalorder %s205, %s219
      %p221 = scmp.eq.s32.totalorder %s27, 0
      %p222 = por %p220, %p221
      %s224 = sadd.s32 %s223, 1
      %p227 = scmp.eq.s32.totalorder %s21, 1
      %p228 = scmp.ne.s32.totalorder %s223, %s225
      %p229 = scmp.eq.s32.totalorder %s21, 0
      %p230 = por %p228, %p229
      %p231 = scmp.ne.s32.totalorder %s223, %s225
      %p232 = scmp.eq.s32.totalorder %s26, 1
      %p233 = por %p231, %p232
      %p234 = scmp.ne.s32.totalorder %s225, %s226
      %p235 = scmp.eq.s32.totalorder %s26, 0
      %p236 = por %p234, %p235
      %p237 = scmp.ne.s32.totalorder %s225, %s226
      %p238 = scmp.eq.s32.totalorder %s27, 1
      %p239 = por %p237, %p238
      %p241 = scmp.ne.s32.totalorder %s226, %s240
      %p242 = scmp.eq.s32.totalorder %s27, 0
      %p243 = por %p241, %p242
      %s245 = sadd.s32 %s244, 1
      %p248 = scmp.eq.s32.totalorder %s21, 1
      %p249 = scmp.ne.s32.totalorder %s244, %s246
      %p250 = scmp.eq.s32.totalorder %s21, 0
      %p251 = por %p249, %p250
      %p252 = scmp.ne.s32.totalorder %s244, %s246
      %p253 = scmp.eq.s32.totalorder %s26, 1
      %p254 = por %p252, %p253
      %p255 = scmp.ne.s32.totalorder %s246, %s247
      %p256 = scmp.eq.s32.totalorder %s26, 0
      %p257 = por %p255, %p256
      %p258 = scmp.ne.s32.totalorder %s246, %s247
      %p259 = scmp.eq.s32.totalorder %s27, 1
      %p260 = por %p258, %p259
      %p262 = scmp.ne.s32.totalorder %s247, %s261
      %p263 = scmp.eq.s32.totalorder %s27, 0
      %p264 = por %p262, %p263
      %s265 = ssub.s32 %s21, %s28
      %p266 = scmp.eq.s32.totalorder %s265, 0
      %s268 = sadd.s32 %s267, 1
      %s269 = scalar_select %p266, %s267, %s268
      %p272 = pneg %p266
      %p273 = scmp.eq.s32.totalorder %s21, 1
      %p274 = por %p272, %p273
      %p275 = scmp.ne.s32.totalorder %s267, %s270
      %p276 = scmp.eq.s32.totalorder %s21, 0
      %p277 = por %p275, %p276
      %p278 = scmp.ne.s32.totalorder %s267, %s270
      %p279 = scmp.eq.s32.totalorder %s26, 1
      %p280 = por %p278, %p279
      %p281 = scmp.ne.s32.totalorder %s270, %s271
      %p282 = scmp.eq.s32.totalorder %s26, 0
      %p283 = por %p281, %p282
      %p284 = scmp.ne.s32.totalorder %s270, %s271
      %p285 = scmp.eq.s32.totalorder %s27, 1
      %p286 = por %p284, %p285
      %p288 = scmp.ne.s32.totalorder %s271, %s287
      %p289 = scmp.eq.s32.totalorder %s27, 0
      %p290 = por %p288, %p289
      %p291 = scmp.le.s32.totalorder 1, %s21
      %p292 = scmp.lt.s32.totalorder %s21, 3
      %p293 = pnand %p291, %p292
      %p294 = pneg %p293
      // Predicated region
      $region9: #{tpu_custom_call.1} parent=5 // pred_check
        _
      $region10: #{tpu_custom_call.1} parent=5 // pred_check_branch
        %296 = sbr.rel (%p293) target = $region12
      $region11: #{tpu_custom_call.1} parent=5 // pred_region
        %s297 = ssub.s32 %s21, 1
        // Predicated region
        $region13: #{tpu_custom_call.1} parent=11 // pred_check
          %p298 = pneg %p68
        $region14: #{tpu_custom_call.1} parent=11 // pred_check_branch
          %300 = sbr.rel (%p298) target = $region16
        $region15: #{tpu_custom_call.1} parent=11 // pred_region
          _
        $region16: #{tpu_custom_call.1} parent=11 // pred_fallthru
          _
        // Predicated region
        $region17: #{tpu_custom_call.1} parent=11 // pred_check
          %p301 = pneg %p89
        $region18: #{tpu_custom_call.1} parent=11 // pred_check_branch
          %303 = sbr.rel (%p301) target = $region20
        $region19: #{tpu_custom_call.1} parent=11 // pred_region
          _
        $region20: #{tpu_custom_call.1} parent=11 // pred_fallthru
          _
        // Predicated region
        $region21: #{tpu_custom_call.1} parent=11 // pred_check
          %p304 = pneg %p110
        $region22: #{tpu_custom_call.1} parent=11 // pred_check_branch
          %306 = sbr.rel (%p304) target = $region24
        $region23: #{tpu_custom_call.1} parent=11 // pred_region
          _
        $region24: #{tpu_custom_call.1} parent=11 // pred_fallthru
          _
        // Predicated region
        $region25: #{tpu_custom_call.1} parent=11 // pred_check
          %p307 = pneg %p131
        $region26: #{tpu_custom_call.1} parent=11 // pred_check_branch
          %309 = sbr.rel (%p307) target = $region28
        $region27: #{tpu_custom_call.1} parent=11 // pred_region
          _
        $region28: #{tpu_custom_call.1} parent=11 // pred_fallthru
          _
        // Predicated region
        $region29: #{tpu_custom_call.1} parent=11 // pred_check
          %p310 = pneg %p152
        $region30: #{tpu_custom_call.1} parent=11 // pred_check_branch
          %312 = sbr.rel (%p310) target = $region32
        $region31: #{tpu_custom_call.1} parent=11 // pred_region
          _
        $region32: #{tpu_custom_call.1} parent=11 // pred_fallthru
          _
        // Predicated region
        $region33: #{tpu_custom_call.1} parent=11 // pred_check
          %p313 = pneg %p173
        $region34: #{tpu_custom_call.1} parent=11 // pred_check_branch
          %315 = sbr.rel (%p313) target = $region36
        $region35: #{tpu_custom_call.1} parent=11 // pred_region
          _
        $region36: #{tpu_custom_call.1} parent=11 // pred_fallthru
          _
        // Predicated region
        $region37: #{tpu_custom_call.1} parent=11 // pred_check
          %p316 = pneg %p194
        $region38: #{tpu_custom_call.1} parent=11 // pred_check_branch
          %318 = sbr.rel (%p316) target = $region40
        $region39: #{tpu_custom_call.1} parent=11 // pred_region
          _
        $region40: #{tpu_custom_call.1} parent=11 // pred_fallthru
          _
        // Predicated region
        $region41: #{tpu_custom_call.1} parent=11 // pred_check
          %p319 = pneg %p215
        $region42: #{tpu_custom_call.1} parent=11 // pred_check_branch
          %321 = sbr.rel (%p319) target = $region44
        $region43: #{tpu_custom_call.1} parent=11 // pred_region
          _
        $region44: #{tpu_custom_call.1} parent=11 // pred_fallthru
          _
        // Predicated region
        $region45: #{tpu_custom_call.1} parent=11 // pred_check
          %p322 = pneg %p236
        $region46: #{tpu_custom_call.1} parent=11 // pred_check_branch
          %324 = sbr.rel (%p322) target = $region48
        $region47: #{tpu_custom_call.1} parent=11 // pred_region
          _
        $region48: #{tpu_custom_call.1} parent=11 // pred_fallthru
          _
        // Predicated region
        $region49: #{tpu_custom_call.1} parent=11 // pred_check
          %p325 = pneg %p257
        $region50: #{tpu_custom_call.1} parent=11 // pred_check_branch
          %327 = sbr.rel (%p325) target = $region52
        $region51: #{tpu_custom_call.1} parent=11 // pred_region
          %329 = vsyncadd [#allocation5], 0
          %s331 = sshll.u32 %s10, 4
          %s332 = int_to_ptr.vmem [resolvable:$true] %s331
          %334 = dma.vmem_to_smem %s332, 16, [#allocation3], [#allocation5]
        $region52: #{tpu_custom_call.1} parent=11 // pred_fallthru
          _
      $region12: #{tpu_custom_call.1} parent=5 // pred_fallthru
        _
      %p335 = scmp.lt.s32.totalorder %s21, 2
      // Predicated region
      $region53: #{tpu_custom_call.1} parent=5 // pred_check
        %p336 = pneg %p335
      $region54: #{tpu_custom_call.1} parent=5 // pred_check_branch
        %338 = sbr.rel (%p336) target = $region56
      $region55: #{tpu_custom_call.1} parent=5 // pred_region
        // Predicated region
        $region57: #{tpu_custom_call.1} parent=55 // pred_check
          %p339 = pneg %p41
        $region58: #{tpu_custom_call.1} parent=55 // pred_check_branch
          %341 = sbr.rel (%p339) target = $region60
        $region59: #{tpu_custom_call.1} parent=55 // pred_region
          %s342 = sand.u32 %s31, 1
          %s343 = sand.u32 %s31, 1
          %s344 = smul.addr %s343, 24
          %s345 = scalar_lea.vmem [#allocation2], %s344
          %s346 = smul.addr %s21, 8
          %s347 = scalar_lea.vmem %s0, %s346
          // Predicated region
          $region61: #{tpu_custom_call.1} parent=59 // pred_check
            _
          $region62: #{tpu_custom_call.1} parent=59 // pred_check_branch
            %349 = sbr.rel (0) target = $region64
          $region63: #{tpu_custom_call.1} parent=59 // pred_region
            // Predicated region
            $region65: #{tpu_custom_call.1} parent=63 // pred_check
              _
            $region66: #{tpu_custom_call.1} parent=63 // pred_check_branch
              %351 = sbr.rel (0) target = $region68
            $region67: #{tpu_custom_call.1} parent=63 // pred_region
              // Predicated region
              $region80: #{tpu_custom_call.1} parent=67 // pred_check
                _
              $region81: #{tpu_custom_call.1} parent=67 // pred_check_branch
                %371 = sbr.rel (0) target = $region83
              $region82: #{tpu_custom_call.1} parent=67 // pred_region
                loop: start=0, step=1, limit=1
                $region84: #{tpu_custom_call.1} parent=82 // loop_pre_header
                  _
                $region85: #{tpu_custom_call.1} parent=82 // loop_header
                  %s373 = sphi 0, %s377
                  %p374 = scmp.ge.s32.totalorder %s373, 1
                  %s378 = sphi %s347, %s347
                  %s379 = sphi %s345, %s345
                $region86: #{tpu_custom_call.1} parent=82 // loop_header_branch
                  %376 = sbr.rel (%p374) target = $region90
                $region87: #{tpu_custom_call.1} parent=82 // loop_body
                  %v380 = vld [vmem:[%s378] sm:$0xff]
                  %381 = vst [vmem:[%s379] sm:$0xff] %v380
                  %v382 = vld [vmem:[%s378 + $0x10] sm:$0xff]
                  %383 = vst [vmem:[%s379 + $0x8] sm:$0xff] %v382
                  %v384 = vld [vmem:[%s378 + $0x20] sm:$0xff]
                  %385 = vst [vmem:[%s379 + $0x10] sm:$0xff] %v384
                $region88: #{tpu_custom_call.1} parent=82 // loop_footer
                  %s377 = sadd.s32 1, %s373
                $region89: #{tpu_custom_call.1} parent=82 // loop_footer_branch
                  %372 = sbr.rel target = $region85
                $region90: #{tpu_custom_call.1} parent=82 // loop_exit
                  _
              $region83: #{tpu_custom_call.1} parent=67 // pred_fallthru
                _
              // Predicated region
              $region91: #{tpu_custom_call.1} parent=67 // pred_check
                _
              $region92: #{tpu_custom_call.1} parent=67 // pred_check_branch
                %387 = sbr.rel target = $region94
              $region93: #{tpu_custom_call.1} parent=67 // pred_region
                _
              $region94: #{tpu_custom_call.1} parent=67 // pred_fallthru
                _
            $region68: #{tpu_custom_call.1} parent=63 // pred_fallthru
              _
            // Predicated region
            $region69: #{tpu_custom_call.1} parent=63 // pred_check
              _
            $region70: #{tpu_custom_call.1} parent=63 // pred_check_branch
              %353 = sbr.rel target = $region72
            $region71: #{tpu_custom_call.1} parent=63 // pred_region
              %s355 = ssub.s32 256, 1
              loop: start=0, step=1, limit=1
              $region73: #{tpu_custom_call.1} parent=71 // loop_pre_header
                _
              $region74: #{tpu_custom_call.1} parent=71 // loop_header
                %s357 = sphi 0, %s361
                %p358 = scmp.ge.s32.totalorder %s357, 1
                %s362 = sphi %s347, %s347
                %s363 = sphi %s345, %s345
              $region75: #{tpu_custom_call.1} parent=71 // loop_header_branch
                %360 = sbr.rel (%p358) target = $region79
              $region76: #{tpu_custom_call.1} parent=71 // loop_body
                %v364 = vld [vmem:[%s362] sm:%s355]
                %365 = vst [vmem:[%s363] sm:%s355] %v364
                %v366 = vld [vmem:[%s362 + $0x10] sm:%s355]
                %367 = vst [vmem:[%s363 + $0x8] sm:%s355] %v366
                %v368 = vld [vmem:[%s362 + $0x20] sm:%s355]
                %369 = vst [vmem:[%s363 + $0x10] sm:%s355] %v368
              $region77: #{tpu_custom_call.1} parent=71 // loop_footer
                %s361 = sadd.s32 1, %s357
              $region78: #{tpu_custom_call.1} parent=71 // loop_footer_branch
                %356 = sbr.rel target = $region74
              $region79: #{tpu_custom_call.1} parent=71 // loop_exit
                _
            $region72: #{tpu_custom_call.1} parent=63 // pred_fallthru
              _
          $region64: #{tpu_custom_call.1} parent=59 // pred_fallthru
            _
          %388 = vnop
        $region60: #{tpu_custom_call.1} parent=55 // pred_fallthru
          _
      $region56: #{tpu_custom_call.1} parent=5 // pred_fallthru
        _
      %p389 = scmp.le.s32.totalorder 1, %s21
      %p390 = scmp.lt.s32.totalorder %s21, 3
      %p391 = pnand %p389, %p390
      %p392 = pneg %p391
      // Predicated region
      $region95: #{tpu_custom_call.1} parent=5 // pred_check
        _
      $region96: #{tpu_custom_call.1} parent=5 // pred_check_branch
        %394 = sbr.rel (%p391) target = $region98
      $region97: #{tpu_custom_call.1} parent=5 // pred_region
        %s395 = ssub.s32 %s21, 1
        %s396 = sand.u32 %s34, 1
        %s397 = sand.u32 %s34, 1
        %s398 = smul.addr %s397, 24
        %s399 = scalar_lea.vmem [#allocation2], %s398
        // Predicated region
        $region99: #{tpu_custom_call.1} parent=97 // pred_check
          %p400 = pneg %p47
        $region100: #{tpu_custom_call.1} parent=97 // pred_check_branch
          %402 = sbr.rel (%p400) target = $region102
        $region101: #{tpu_custom_call.1} parent=97 // pred_region
          _
        $region102: #{tpu_custom_call.1} parent=97 // pred_fallthru
          _
        // Predicated region
        $region103: #{tpu_custom_call.1} parent=97 // pred_check
          %p403 = pneg %p257
        $region104: #{tpu_custom_call.1} parent=97 // pred_check_branch
          %405 = sbr.rel (%p403) target = $region106
        $region105: #{tpu_custom_call.1} parent=97 // pred_region
          %407 = dma.done [#allocation5], 16
        $region106: #{tpu_custom_call.1} parent=97 // pred_fallthru
          _
        %408 = sfence
        %s409 = sand.u32 %s34, 1
        %s410 = sand.u32 %s34, 1
        %s411 = smul.addr %s410, 24
        %s412 = scalar_lea.vmem [#allocation2], %s411
        %p413 = pneg %p47
        %p414 = pneg %p44
        %p415 = pneg %p68
        %p416 = pneg %p65
        %p417 = pneg %p89
        %p418 = pneg %p86
        %p419 = pneg %p110
        %p420 = pneg %p107
        %p421 = pneg %p131
        %p422 = pneg %p128
        %p423 = pneg %p152
        %p424 = pneg %p149
        %p425 = pneg %p173
        %p426 = pneg %p170
        %p427 = pneg %p194
        %p428 = pneg %p191
        %p429 = pneg %p215
        %p430 = pneg %p212
        %p431 = pneg %p236
        %p432 = pneg %p233
        %p433 = pneg %p257
        %p434 = pneg %p254
        %p435 = pneg %p283
        %p436 = pneg %p280
        %s437 = sand.u32 %s270, 1
        %s438 = scalar_lea.sflag [#allocation4], %s437
        %s439 = sand.u32 %s270, 1
        %s440 = smul.addr %s439, 16
        %s441 = scalar_lea.vmem [#allocation6], %s440
        %v442 = vld [vmem:[%s399] sm:$0xff]
        %v443 = vld [vmem:[%s399 + $0x8] sm:$0xff]
        %v444 = vld [vmem:[%s399 + $0x10] sm:$0x1]
        %v445 = vld [vmem:[%s9] sm:$0xff]
        %v446 = vld [vmem:[%s9 + $0x8] sm:$0xff]
        %v447 = vld [vmem:[%s9 + $0x10] sm:$0xff]
        %v448 = vld [vmem:[%s9 + $0x18] sm:$0xff]
        %v449 = vld [vmem:[%s9 + $0x20] sm:$0xff]
        %v450 = vld [vmem:[%s9 + $0x28] sm:$0xff]
        %v451 = vld [vmem:[%s9 + $0x30] sm:$0xff]
        %v452 = vld [vmem:[%s9 + $0x38] sm:$0xff]
        %v453 = vld [vmem:[%s9 + $0x40] sm:$0xff]
        %v454 = vld [vmem:[%s9 + $0x48] sm:$0xff]
        %v455 = vld [vmem:[%s9 + $0x50] sm:$0xff]
        %v456 = vld [vmem:[%s9 + $0x58] sm:$0xff]
        %s457 = sld [smem:[#allocation3]]
        %s458 = sld [smem:[#allocation3 + $0x1]]
        %v459 = vld [vmem:[%s2] sm:$0xff]
        %v460 = vld [vmem:[%s2 + $0x8] sm:$0xff]
        %v461 = vld [vmem:[%s2 + $0x10] sm:$0xff]
        %v462 = vld [vmem:[%s2 + $0x18] sm:$0xff]
        %s463 = scalar_lea.vmem %s2, 32
        %v464 = vld [vmem:[%s463] sm:$0xff]
        %v465 = vld [vmem:[%s463 + $0x8] sm:$0xff]
        %v466 = vld [vmem:[%s463 + $0x10] sm:$0xff]
        %v467 = vld [vmem:[%s463 + $0x18] sm:$0xff]
        %v468 = vld [vmem:[%s6] sm:$0xff]
        %s469 = scalar_lea.vmem %s6, 8
        %v470 = vld [vmem:[%s469] sm:$0xff]
        %v471 = vld [vmem:[%s3] sm:$0xff]
        %v472 = vld [vmem:[%s3 + $0x8] sm:$0xff]
        %v473 = vld [vmem:[%s4] sm:$0x1]
        %v474 = vld [vmem:[%s7] sm:$0xf]
        %v475 = vld [vmem:[%s8] sm:$0xf]
        %v476 = vld [vmem:[%s5] sm:$0xff]
        %v477 = vld [vmem:[%s5 + $0x8] sm:$0xff]
        %v478 = vld [vmem:[%s5 + $0x10] sm:$0xff]
        %v479 = vld [vmem:[%s5 + $0x18] sm:$0xff]
        %v480 = vld [vmem:[%s5 + $0x20] sm:$0xff]
        %v481 = vld [vmem:[%s5 + $0x28] sm:$0xff]
        %v482 = vld [vmem:[%s5 + $0x30] sm:$0xff]
        %v483 = vld [vmem:[%s5 + $0x38] sm:$0xff]
        %v484 = vld [vmem:[%s5 + $0x40] sm:$0xff]
        %v485 = vld [vmem:[%s5 + $0x48] sm:$0xff]
        %v486 = vld [vmem:[%s5 + $0x50] sm:$0xff]
        %v487 = vld [vmem:[%s5 + $0x58] sm:$0xff]
        %v488 = vld [vmem:[%s1] sm:$0xff]
        %v489 = vld [vmem:[%s1 + $0x8] sm:$0xff]
        %v490 = vld [vmem:[%s1 + $0x10] sm:$0xff]
        %vm491 = vcmask 138240
        %v493 = vsel %vm491, %v488, 0
        %v496 = vsel %vm491, %v489, 0
        %v499 = vsel %vm491, %v490, 0
        %vm501 = vcmask 1040384
        %v503 = vsel %vm501, %v444, 0
        %505 = vmatpush.msra.mxu0 0.0
        %506 = vmatpush.msra.mxu0 0.0
        %507 = vmatpush.msra.mxu0 0.0
        %508 = vmatpush.msra.mxu0 0.0
        %509 = vmatpush.msra.mxu0 0.0
        %510 = vmatpush.msra.mxu0 0.0
        %511 = vmatpush.msra.mxu0 0.0
        %512 = vmatpush.msra.mxu0 0.0
        %513 = vmatpush.msra.mxu0 0.0
        %514 = vmatpush.msra.mxu0 0.0
        %515 = vmatpush.msra.mxu0 0.0
        %516 = vmatpush.msra.mxu0 0.0
        %517 = vmatpush.msra.mxu0 0.0
        %518 = vmatpush.msra.mxu0 %v503
        %519 = vmatpush.msra.mxu0 %v443
        %520 = vmatpush.msra.mxu0 %v442
        %521 = vmatmul.f32.gmra.mxu0 %v493
        %v522 = vpop.f32.mrf.mxu0
        %v523 = vadd.f32 0.0, %v522
        %524 = vmatmul.f32.gmra.mxu0 %v496
        %v525 = vpop.f32.mrf.mxu0
        %v526 = vadd.f32 0.0, %v525
        %527 = vmatmul.f32.gmra.mxu0 %v499
        %v528 = vpop.f32.mrf.mxu0
        %v529 = vadd.f32 0.0, %v528
        %530 = vdwg.mxu0
        %v531 = vmax.f32 %v523, 0.0
        %v532 = vmax.f32 %v526, 0.0
        %v533 = vmax.f32 %v529, 0.0
        %v534 = vrot.slane %v533, 4
        %v535 = vadd.f32 %v533, %v534
        %v536 = vrot.slane %v535, 2
        %v537 = vadd.f32 %v535, %v536
        %v538 = vrot.slane %v537, 1
        %v539 = vadd.f32 %v537, %v538
        %v540 = vrcp.pop 8.0
        %v541 = vmul.f32 8.0, %v540
        %v542 = vsub.f32 1.0, %v541
        %v543 = vmul.f32 %v540, %v542
        %v544 = vadd.f32 %v540, %v543
        %vm545 = vweird.f32 %v540
        %v546 = vsel %vm545, %v540, %v544
        %v547 = vmul.f32 %v539, %v546
        %vm548 = vcmask 523264
        %v550 = vsel %vm548, %v459, 0
        %v553 = vsel %vm548, %v460, 0
        %v556 = vsel %vm548, %v461, 0
        %v559 = vsel %vm548, %v462, 0
        %v562 = vsel %vm548, %v532, 0
        %564 = vmatpush.xpose.msra.mxu0 0.0
        %565 = vmatpush.xpose.msra.mxu0 0.0
        %566 = vmatpush.xpose.msra.mxu0 0.0
        %567 = vmatpush.xpose.msra.mxu0 0.0
        %568 = vmatpush.xpose.msra.mxu0 0.0
        %569 = vmatpush.xpose.msra.mxu0 0.0
        %570 = vmatpush.xpose.msra.mxu0 0.0
        %571 = vmatpush.xpose.msra.mxu0 0.0
        %572 = vmatpush.xpose.msra.mxu0 0.0
        %573 = vmatpush.xpose.msra.mxu0 0.0
        %574 = vmatpush.xpose.msra.mxu0 0.0
        %575 = vmatpush.xpose.msra.mxu0 0.0
        %576 = vmatpush.xpose.msra.mxu0 0.0
        %577 = vmatpush.xpose.msra.mxu0 0.0
        %578 = vmatpush.xpose.msra.mxu0 0.0
        %579 = vmatpush.xpose.msra.mxu0 %v562
        %580 = vmatmul.f32.gmra.mxu0 %v550
        %v581 = vpop.f32.mrf.mxu0
        %v582 = vadd.f32 0.0, %v581
        %583 = vmatmul.f32.gmra.mxu0 %v553
        %v584 = vpop.f32.mrf.mxu0
        %v585 = vadd.f32 0.0, %v584
        %586 = vmatmul.f32.gmra.mxu0 %v556
        %v587 = vpop.f32.mrf.mxu0
        %v588 = vadd.f32 0.0, %v587
        %589 = vmatmul.f32.gmra.mxu0 %v559
        %v590 = vpop.f32.mrf.mxu0
        %v591 = vadd.f32 0.0, %v590
        %592 = vdwg.mxu0
        %v594 = vsel %vm548, %v464, 0
        %v597 = vsel %vm548, %v465, 0
        %v600 = vsel %vm548, %v466, 0
        %v603 = vsel %vm548, %v467, 0
        %v606 = vsel %vm548, %v531, 0
        %608 = vmatpush.xpose.msra.mxu0 0.0
        %609 = vmatpush.xpose.msra.mxu0 0.0
        %610 = vmatpush.xpose.msra.mxu0 0.0
        %611 = vmatpush.xpose.msra.mxu0 0.0
        %612 = vmatpush.xpose.msra.mxu0 0.0
        %613 = vmatpush.xpose.msra.mxu0 0.0
        %614 = vmatpush.xpose.msra.mxu0 0.0
        %615 = vmatpush.xpose.msra.mxu0 0.0
        %616 = vmatpush.xpose.msra.mxu0 0.0
        %617 = vmatpush.xpose.msra.mxu0 0.0
        %618 = vmatpush.xpose.msra.mxu0 0.0
        %619 = vmatpush.xpose.msra.mxu0 0.0
        %620 = vmatpush.xpose.msra.mxu0 0.0
        %621 = vmatpush.xpose.msra.mxu0 0.0
        %622 = vmatpush.xpose.msra.mxu0 0.0
        %623 = vmatpush.xpose.msra.mxu0 %v606
        %624 = vmatmul.f32.gmra.mxu0 %v594
        %v625 = vpop.f32.mrf.mxu0
        %v626 = vadd.f32 0.0, %v625
        %627 = vmatmul.f32.gmra.mxu0 %v597
        %v628 = vpop.f32.mrf.mxu0
        %v629 = vadd.f32 0.0, %v628
        %630 = vmatmul.f32.gmra.mxu0 %v600
        %v631 = vpop.f32.mrf.mxu0
        %v632 = vadd.f32 0.0, %v631
        %633 = vmatmul.f32.gmra.mxu0 %v603
        %v634 = vpop.f32.mrf.mxu0
        %v635 = vadd.f32 0.0, %v634
        %636 = vdwg.mxu0
        %vm637 = vcmask 64512
        %v639 = vsel %vm637, %v626, 0
        %v642 = vsel %vm637, %v629, 0
        %v645 = vsel %vm637, %v632, 0
        %v648 = vsel %vm637, %v635, 0
        %650 = vmatpush.msra.mxu0 0.0
        %651 = vmatpush.msra.mxu0 0.0
        %652 = vmatpush.msra.mxu0 0.0
        %653 = vmatpush.msra.mxu0 0.0
        %654 = vmatpush.msra.mxu0 0.0
        %655 = vmatpush.msra.mxu0 0.0
        %656 = vmatpush.msra.mxu0 0.0
        %657 = vmatpush.msra.mxu0 0.0
        %658 = vmatpush.msra.mxu0 0.0
        %659 = vmatpush.msra.mxu0 0.0
        %660 = vmatpush.msra.mxu0 0.0
        %661 = vmatpush.msra.mxu0 0.0
        %662 = vmatpush.msra.mxu0 0.0
        %663 = vmatpush.msra.mxu0 0.0
        %664 = vmatpush.msra.mxu0 0.0
        %665 = vmatpush.msra.mxu0 %v532
        %666 = vmatmul.f32.gmra.mxu0 %v639
        %v667 = vpop.f32.mrf.mxu0
        %v668 = vadd.f32 0.0, %v667
        %669 = vmatmul.f32.gmra.mxu0 %v642
        %v670 = vpop.f32.mrf.mxu0
        %v671 = vadd.f32 0.0, %v670
        %672 = vmatmul.f32.gmra.mxu0 %v645
        %v673 = vpop.f32.mrf.mxu0
        %v674 = vadd.f32 0.0, %v673
        %675 = vmatmul.f32.gmra.mxu0 %v648
        %v676 = vpop.f32.mrf.mxu0
        %v677 = vadd.f32 0.0, %v676
        %678 = vdwg.mxu0
        %v680 = vsel %vm637, %v582, 0
        %v683 = vsel %vm637, %v585, 0
        %v686 = vsel %vm637, %v588, 0
        %v689 = vsel %vm637, %v591, 0
        %691 = vmatpush.msra.mxu0 0.0
        %692 = vmatpush.msra.mxu0 0.0
        %693 = vmatpush.msra.mxu0 0.0
        %694 = vmatpush.msra.mxu0 0.0
        %695 = vmatpush.msra.mxu0 0.0
        %696 = vmatpush.msra.mxu0 0.0
        %697 = vmatpush.msra.mxu0 0.0
        %698 = vmatpush.msra.mxu0 0.0
        %699 = vmatpush.msra.mxu0 0.0
        %700 = vmatpush.msra.mxu0 0.0
        %701 = vmatpush.msra.mxu0 0.0
        %702 = vmatpush.msra.mxu0 0.0
        %703 = vmatpush.msra.mxu0 0.0
        %704 = vmatpush.msra.mxu0 0.0
        %705 = vmatpush.msra.mxu0 0.0
        %706 = vmatpush.msra.mxu0 %v531
        %707 = vmatmul.f32.gmra.mxu0 %v680
        %v708 = vpop.f32.mrf.mxu0
        %v709 = vadd.f32 %v668, %v708
        %710 = vmatmul.f32.gmra.mxu0 %v683
        %v711 = vpop.f32.mrf.mxu0
        %v712 = vadd.f32 %v671, %v711
        %713 = vmatmul.f32.gmra.mxu0 %v686
        %v714 = vpop.f32.mrf.mxu0
        %v715 = vadd.f32 %v674, %v714
        %716 = vmatmul.f32.gmra.mxu0 %v689
        %v717 = vpop.f32.mrf.mxu0
        %v718 = vadd.f32 %v677, %v717
        %719 = vdwg.mxu0
        %720 = vrot.lane.b32.xlu0 %v532, 64
        %v721 = vpop.permute.xlu0 %720
        %v722 = vsel %vm548, %v721, 0
        %724 = vmatpush.xpose.msra.mxu0 0.0
        %725 = vmatpush.xpose.msra.mxu0 0.0
        %726 = vmatpush.xpose.msra.mxu0 0.0
        %727 = vmatpush.xpose.msra.mxu0 0.0
        %728 = vmatpush.xpose.msra.mxu0 0.0
        %729 = vmatpush.xpose.msra.mxu0 0.0
        %730 = vmatpush.xpose.msra.mxu0 0.0
        %731 = vmatpush.xpose.msra.mxu0 0.0
        %732 = vmatpush.xpose.msra.mxu0 0.0
        %733 = vmatpush.xpose.msra.mxu0 0.0
        %734 = vmatpush.xpose.msra.mxu0 0.0
        %735 = vmatpush.xpose.msra.mxu0 0.0
        %736 = vmatpush.xpose.msra.mxu0 0.0
        %737 = vmatpush.xpose.msra.mxu0 0.0
        %738 = vmatpush.xpose.msra.mxu0 0.0
        %739 = vmatpush.xpose.msra.mxu0 %v722
        %740 = vmatmul.f32.gmra.mxu0 %v550
        %v741 = vpop.f32.mrf.mxu0
        %v742 = vadd.f32 0.0, %v741
        %743 = vmatmul.f32.gmra.mxu0 %v553
        %v744 = vpop.f32.mrf.mxu0
        %v745 = vadd.f32 0.0, %v744
        %746 = vmatmul.f32.gmra.mxu0 %v556
        %v747 = vpop.f32.mrf.mxu0
        %v748 = vadd.f32 0.0, %v747
        %749 = vmatmul.f32.gmra.mxu0 %v559
        %v750 = vpop.f32.mrf.mxu0
        %v751 = vadd.f32 0.0, %v750
        %752 = vdwg.mxu0
        %753 = vrot.lane.b32.xlu0 %v531, 64
        %v754 = vpop.permute.xlu0 %753
        %v755 = vsel %vm548, %v754, 0
        %757 = vmatpush.xpose.msra.mxu0 0.0
        %758 = vmatpush.xpose.msra.mxu0 0.0
        %759 = vmatpush.xpose.msra.mxu0 0.0
        %760 = vmatpush.xpose.msra.mxu0 0.0
        %761 = vmatpush.xpose.msra.mxu0 0.0
        %762 = vmatpush.xpose.msra.mxu0 0.0
        %763 = vmatpush.xpose.msra.mxu0 0.0
        %764 = vmatpush.xpose.msra.mxu0 0.0
        %765 = vmatpush.xpose.msra.mxu0 0.0
        %766 = vmatpush.xpose.msra.mxu0 0.0
        %767 = vmatpush.xpose.msra.mxu0 0.0
        %768 = vmatpush.xpose.msra.mxu0 0.0
        %769 = vmatpush.xpose.msra.mxu0 0.0
        %770 = vmatpush.xpose.msra.mxu0 0.0
        %771 = vmatpush.xpose.msra.mxu0 0.0
        %772 = vmatpush.xpose.msra.mxu0 %v755
        %773 = vmatmul.f32.gmra.mxu0 %v594
        %v774 = vpop.f32.mrf.mxu0
        %v775 = vadd.f32 0.0, %v774
        %776 = vmatmul.f32.gmra.mxu0 %v597
        %v777 = vpop.f32.mrf.mxu0
        %v778 = vadd.f32 0.0, %v777
        %779 = vmatmul.f32.gmra.mxu0 %v600
        %v780 = vpop.f32.mrf.mxu0
        %v781 = vadd.f32 0.0, %v780
        %782 = vmatmul.f32.gmra.mxu0 %v603
        %v783 = vpop.f32.mrf.mxu0
        %v784 = vadd.f32 0.0, %v783
        %785 = vdwg.mxu0
        %v788 = vsel %vm637, %v775, 0
        %v791 = vsel %vm637, %v778, 0
        %v794 = vsel %vm637, %v781, 0
        %v797 = vsel %vm637, %v784, 0
        %799 = vmatpush.msra.mxu0 0.0
        %800 = vmatpush.msra.mxu0 0.0
        %801 = vmatpush.msra.mxu0 0.0
        %802 = vmatpush.msra.mxu0 0.0
        %803 = vmatpush.msra.mxu0 0.0
        %804 = vmatpush.msra.mxu0 0.0
        %805 = vmatpush.msra.mxu0 0.0
        %806 = vmatpush.msra.mxu0 0.0
        %807 = vmatpush.msra.mxu0 0.0
        %808 = vmatpush.msra.mxu0 0.0
        %809 = vmatpush.msra.mxu0 0.0
        %810 = vmatpush.msra.mxu0 0.0
        %811 = vmatpush.msra.mxu0 0.0
        %812 = vmatpush.msra.mxu0 0.0
        %813 = vmatpush.msra.mxu0 0.0
        %814 = vmatpush.msra.mxu0 %v721
        %815 = vmatmul.f32.gmra.mxu0 %v788
        %v816 = vpop.f32.mrf.mxu0
        %v817 = vadd.f32 0.0, %v816
        %818 = vmatmul.f32.gmra.mxu0 %v791
        %v819 = vpop.f32.mrf.mxu0
        %v820 = vadd.f32 0.0, %v819
        %821 = vmatmul.f32.gmra.mxu0 %v794
        %v822 = vpop.f32.mrf.mxu0
        %v823 = vadd.f32 0.0, %v822
        %824 = vmatmul.f32.gmra.mxu0 %v797
        %v825 = vpop.f32.mrf.mxu0
        %v826 = vadd.f32 0.0, %v825
        %827 = vdwg.mxu0
        %v830 = vsel %vm637, %v742, 0
        %v833 = vsel %vm637, %v745, 0
        %v836 = vsel %vm637, %v748, 0
        %v839 = vsel %vm637, %v751, 0
        %841 = vmatpush.msra.mxu0 0.0
        %842 = vmatpush.msra.mxu0 0.0
        %843 = vmatpush.msra.mxu0 0.0
        %844 = vmatpush.msra.mxu0 0.0
        %845 = vmatpush.msra.mxu0 0.0
        %846 = vmatpush.msra.mxu0 0.0
        %847 = vmatpush.msra.mxu0 0.0
        %848 = vmatpush.msra.mxu0 0.0
        %849 = vmatpush.msra.mxu0 0.0
        %850 = vmatpush.msra.mxu0 0.0
        %851 = vmatpush.msra.mxu0 0.0
        %852 = vmatpush.msra.mxu0 0.0
        %853 = vmatpush.msra.mxu0 0.0
        %854 = vmatpush.msra.mxu0 0.0
        %855 = vmatpush.msra.mxu0 0.0
        %856 = vmatpush.msra.mxu0 %v754
        %857 = vmatmul.f32.gmra.mxu0 %v830
        %v858 = vpop.f32.mrf.mxu0
        %v859 = vadd.f32 %v817, %v858
        %860 = vmatmul.f32.gmra.mxu0 %v833
        %v861 = vpop.f32.mrf.mxu0
        %v862 = vadd.f32 %v820, %v861
        %863 = vmatmul.f32.gmra.mxu0 %v836
        %v864 = vpop.f32.mrf.mxu0
        %v865 = vadd.f32 %v823, %v864
        %866 = vmatmul.f32.gmra.mxu0 %v839
        %v867 = vpop.f32.mrf.mxu0
        %v868 = vadd.f32 %v826, %v867
        %869 = vdwg.mxu0
        %874 = vrot.lane.b32.xlu0 %v859, 64
        %v875 = vpop.permute.xlu0 %874
        %876 = vrot.lane.b32.xlu0 %v862, 64
        %v877 = vpop.permute.xlu0 %876
        %878 = vrot.lane.b32.xlu0 %v865, 64
        %v879 = vpop.permute.xlu0 %878
        %880 = vrot.lane.b32.xlu0 %v868, 64
        %v881 = vpop.permute.xlu0 %880
        %v886 = vsel %vm548, %v709, %v875
        %v887 = vsel %vm548, %v712, %v877
        %v888 = vsel %vm548, %v715, %v879
        %v889 = vsel %vm548, %v718, %v881
        %891 = vset.pattern.permute.xlu0 1
        %892 = vperm.xlu0 %891, %v445
        %v893 = vpop.permute.xlu0 %892
        %896 = vset.pattern.permute.xlu0 1
        %897 = vperm.xlu0 %896, %v446
        %v898 = vpop.permute.xlu0 %897
        %901 = vset.pattern.permute.xlu0 1
        %902 = vperm.xlu0 %901, %v447
        %v903 = vpop.permute.xlu0 %902
        %906 = vset.pattern.permute.xlu0 1
        %907 = vperm.xlu0 %906, %v448
        %v908 = vpop.permute.xlu0 %907
        %v910 = vadd.f32 %v886, %v893
        %v911 = vadd.f32 %v887, %v898
        %v912 = vadd.f32 %v888, %v903
        %v913 = vadd.f32 %v889, %v908
        %v914 = vmax.f32 %v910, 0.0
        %v915 = vmax.f32 %v911, 0.0
        %v916 = vmax.f32 %v912, 0.0
        %v917 = vmax.f32 %v913, 0.0
        %918 = vset.pattern.permute.xlu0 3
        %919 = vperm.xlu0 %918, %v445
        %v920 = vpop.permute.xlu0 %919
        %922 = vset.pattern.permute.xlu0 3
        %923 = vperm.xlu0 %922, %v446
        %v924 = vpop.permute.xlu0 %923
        %v926 = vmul.f32 %v920, %v547
        %v927 = vmul.f32 %v924, %v547
        %vm928 = vcmask 261120
        %v930 = vsel %vm928, %v471, 0
        %v933 = vsel %vm928, %v472, 0
        %935 = vmatpush.msra.mxu0 0.0
        %936 = vmatpush.msra.mxu0 0.0
        %937 = vmatpush.msra.mxu0 0.0
        %938 = vmatpush.msra.mxu0 0.0
        %939 = vmatpush.msra.mxu0 0.0
        %940 = vmatpush.msra.mxu0 0.0
        %941 = vmatpush.msra.mxu0 0.0
        %942 = vmatpush.msra.mxu0 0.0
        %943 = vmatpush.msra.mxu0 0.0
        %944 = vmatpush.msra.mxu0 0.0
        %945 = vmatpush.msra.mxu0 0.0
        %946 = vmatpush.msra.mxu0 0.0
        %947 = vmatpush.msra.mxu0 %v917
        %948 = vmatpush.msra.mxu0 %v916
        %949 = vmatpush.msra.mxu0 %v915
        %950 = vmatpush.msra.mxu0 %v914
        %951 = vmatmul.f32.gmra.mxu0 %v930
        %v952 = vpop.f32.mrf.mxu0
        %v953 = vadd.f32 0.0, %v952
        %954 = vmatmul.f32.gmra.mxu0 %v933
        %v955 = vpop.f32.mrf.mxu0
        %v956 = vadd.f32 0.0, %v955
        %957 = vdwg.mxu0
        %v958 = vadd.f32 %v926, %v953
        %v959 = vadd.f32 %v927, %v956
        %960 = vset.pattern.permute.xlu0 4
        %961 = vperm.xlu0 %960, %v445
        %v962 = vpop.permute.xlu0 %961
        %964 = vset.pattern.permute.xlu0 4
        %965 = vperm.xlu0 %964, %v446
        %v966 = vpop.permute.xlu0 %965
        %v968 = vadd.f32 %v958, %v962
        %v969 = vadd.f32 %v959, %v966
        %v970 = vmax.f32 %v968, 0.0
        %v971 = vmax.f32 %v969, 0.0
        %v972 = vstv %s457
        %vm973 = vcmask 130048
        %v975 = vsel %vm973, %v473, 0
        %977 = vmatpush.msra.mxu0 0.0
        %978 = vmatpush.msra.mxu0 0.0
        %979 = vmatpush.msra.mxu0 0.0
        %980 = vmatpush.msra.mxu0 0.0
        %981 = vmatpush.msra.mxu0 0.0
        %982 = vmatpush.msra.mxu0 0.0
        %983 = vmatpush.msra.mxu0 0.0
        %984 = vmatpush.msra.mxu0 0.0
        %985 = vmatpush.msra.mxu0 0.0
        %986 = vmatpush.msra.mxu0 0.0
        %987 = vmatpush.msra.mxu0 0.0
        %988 = vmatpush.msra.mxu0 0.0
        %989 = vmatpush.msra.mxu0 0.0
        %990 = vmatpush.msra.mxu0 0.0
        %991 = vmatpush.msra.mxu0 %v971
        %992 = vmatpush.msra.mxu0 %v970
        %993 = vmatmul.f32.gmra.mxu0 %v975
        %v994 = vpop.f32.mrf.mxu0
        %v995 = vadd.f32 %v972, %v994
        %996 = vdwg.mxu0
        %v997 = vxor.u32 %v995, 2147483648
        %v998 = vmul.f32 %v997, 1.442695
        %v999 = vpow.pop %v998
        %v1000 = vadd.f32 %v999, 1.0
        %v1001 = vrcp.pop %v1000
        %v1002 = vmul.f32 %v1000, %v1001
        %v1003 = vsub.f32 1.0, %v1002
        %v1004 = vmul.f32 %v1001, %v1003
        %v1005 = vadd.f32 %v1001, %v1004
        %vm1006 = vweird.f32 %v1000
        %vm1007 = vweird.f32 %v1001
        %vm1008 = vmor %vm1006, %vm1007
        %v1009 = vsel %vm1008, %v1001, %v1005
        %v1010 = vand.u32 2147483647, %v1000
        %vm1011 = vcmp.eq.f32.partialorder %v1010, 8.507059e+37
        %v1012 = vand.u32 %v1000, 2147483648
        %v1013 = vor.u32 1.1754944e-38, %v1012
        %v1014 = vsel %vm1011, %v1013, %v1009
        %v1015 = vmul.f32 1.0, %v1014
        %v1016 = vperm.slane %v1015, 0
        %v1017 = vmul.f32 %v1016, %v442
        %v1018 = vmul.f32 %v1016, %v443
        %1019 = vset.pattern.permute.xlu0 0
        %1020 = vperm.xlu0 %1019, %v445
        %v1021 = vpop.permute.xlu0 %1020
        %1023 = vset.pattern.permute.xlu0 0
        %1024 = vperm.xlu0 %1023, %v446
        %v1025 = vpop.permute.xlu0 %1024
        %1027 = vset.pattern.permute.xlu0 0
        %1028 = vperm.xlu0 %1027, %v447
        %v1029 = vpop.permute.xlu0 %1028
        %1031 = vset.pattern.permute.xlu0 0
        %1032 = vperm.xlu0 %1031, %v448
        %v1033 = vpop.permute.xlu0 %1032
        %1036 = vset.pattern.permute.xlu0 0
        %1037 = vperm.xlu0 %1036, %v449
        %v1038 = vpop.permute.xlu0 %1037
        %1041 = vset.pattern.permute.xlu0 0
        %1042 = vperm.xlu0 %1041, %v450
        %v1043 = vpop.permute.xlu0 %1042
        %1046 = vset.pattern.permute.xlu0 0
        %1047 = vperm.xlu0 %1046, %v451
        %v1048 = vpop.permute.xlu0 %1047
        %1051 = vset.pattern.permute.xlu0 0
        %1052 = vperm.xlu0 %1051, %v452
        %v1053 = vpop.permute.xlu0 %1052
        %1056 = vset.pattern.permute.xlu0 0
        %1057 = vperm.xlu0 %1056, %v453
        %v1058 = vpop.permute.xlu0 %1057
        %1061 = vset.pattern.permute.xlu0 0
        %1062 = vperm.xlu0 %1061, %v454
        %v1063 = vpop.permute.xlu0 %1062
        %1066 = vset.pattern.permute.xlu0 0
        %1067 = vperm.xlu0 %1066, %v455
        %v1068 = vpop.permute.xlu0 %1067
        %1071 = vset.pattern.permute.xlu0 0
        %1072 = vperm.xlu0 %1071, %v456
        %v1073 = vpop.permute.xlu0 %1072
        %1075 = vset.pattern.permute.xlu0 2
        %1076 = vperm.xlu0 %1075, %v445
        %v1077 = vpop.permute.xlu0 %1076
        %1079 = vset.pattern.permute.xlu0 5
        %1080 = vperm.xlu0 %1079, %v445
        %v1081 = vpop.permute.xlu0 %1080
        %1083 = vset.pattern.permute.xlu0 6
        %1084 = vperm.xlu0 %1083, %v445
        %v1085 = vpop.permute.xlu0 %1084
        %v1088 = vsel %vm548, %v476, 0
        %v1091 = vsel %vm548, %v477, 0
        %v1094 = vsel %vm548, %v478, 0
        %v1097 = vsel %vm548, %v479, 0
        %v1100 = vsel %vm548, %v480, 0
        %v1103 = vsel %vm548, %v481, 0
        %v1106 = vsel %vm548, %v482, 0
        %v1109 = vsel %vm548, %v483, 0
        %v1112 = vsel %vm548, %v484, 0
        %v1115 = vsel %vm548, %v485, 0
        %v1118 = vsel %vm548, %v486, 0
        %v1121 = vsel %vm548, %v487, 0
        %v1124 = vsel %vm548, %v1017, 0
        %v1127 = vsel %vm548, %v1018, 0
        %1129 = vmatpush.xpose.msra.mxu0 0.0
        %1130 = vmatpush.xpose.msra.mxu0 0.0
        %1131 = vmatpush.xpose.msra.mxu0 0.0
        %1132 = vmatpush.xpose.msra.mxu0 0.0
        %1133 = vmatpush.xpose.msra.mxu0 0.0
        %1134 = vmatpush.xpose.msra.mxu0 0.0
        %1135 = vmatpush.xpose.msra.mxu0 0.0
        %1136 = vmatpush.xpose.msra.mxu0 0.0
        %1137 = vmatpush.xpose.msra.mxu0 0.0
        %1138 = vmatpush.xpose.msra.mxu0 0.0
        %1139 = vmatpush.xpose.msra.mxu0 0.0
        %1140 = vmatpush.xpose.msra.mxu0 0.0
        %1141 = vmatpush.xpose.msra.mxu0 0.0
        %1142 = vmatpush.xpose.msra.mxu0 0.0
        %1143 = vmatpush.xpose.msra.mxu0 %v1127
        %1144 = vmatpush.xpose.msra.mxu0 %v1124
        %1145 = vmatmul.f32.gmra.mxu0 %v1088
        %v1146 = vpop.f32.mrf.mxu0
        %v1147 = vadd.f32 %v1021, %v1146
        %1148 = vmatmul.f32.gmra.mxu0 %v1091
        %v1149 = vpop.f32.mrf.mxu0
        %v1150 = vadd.f32 %v1025, %v1149
        %1151 = vmatmul.f32.gmra.mxu0 %v1094
        %v1152 = vpop.f32.mrf.mxu0
        %v1153 = vadd.f32 %v1029, %v1152
        %1154 = vmatmul.f32.gmra.mxu0 %v1097
        %v1155 = vpop.f32.mrf.mxu0
        %v1156 = vadd.f32 %v1033, %v1155
        %1157 = vmatmul.f32.gmra.mxu0 %v1100
        %v1158 = vpop.f32.mrf.mxu0
        %v1159 = vadd.f32 %v1038, %v1158
        %1160 = vmatmul.f32.gmra.mxu0 %v1103
        %v1161 = vpop.f32.mrf.mxu0
        %v1162 = vadd.f32 %v1043, %v1161
        %1163 = vmatmul.f32.gmra.mxu0 %v1106
        %v1164 = vpop.f32.mrf.mxu0
        %v1165 = vadd.f32 %v1048, %v1164
        %1166 = vmatmul.f32.gmra.mxu0 %v1109
        %v1167 = vpop.f32.mrf.mxu0
        %v1168 = vadd.f32 %v1053, %v1167
        %1169 = vmatmul.f32.gmra.mxu0 %v1112
        %v1170 = vpop.f32.mrf.mxu0
        %v1171 = vadd.f32 %v1058, %v1170
        %1172 = vmatmul.f32.gmra.mxu0 %v1115
        %v1173 = vpop.f32.mrf.mxu0
        %v1174 = vadd.f32 %v1063, %v1173
        %1175 = vmatmul.f32.gmra.mxu0 %v1118
        %v1176 = vpop.f32.mrf.mxu0
        %v1177 = vadd.f32 %v1068, %v1176
        %1178 = vmatmul.f32.gmra.mxu0 %v1121
        %v1179 = vpop.f32.mrf.mxu0
        %v1180 = vadd.f32 %v1073, %v1179
        %1181 = vdwg.mxu0
        %v1182 = vmax.f32 %v1147, 0.0
        %v1183 = vmax.f32 %v1150, 0.0
        %v1184 = vmax.f32 %v1153, 0.0
        %v1185 = vmax.f32 %v1156, 0.0
        %v1186 = vmax.f32 %v1159, 0.0
        %v1187 = vmax.f32 %v1162, 0.0
        %v1188 = vmax.f32 %v1165, 0.0
        %v1189 = vmax.f32 %v1168, 0.0
        %v1190 = vmax.f32 %v1171, 0.0
        %v1191 = vmax.f32 %v1174, 0.0
        %v1192 = vmax.f32 %v1177, 0.0
        %v1193 = vmax.f32 %v1180, 0.0
        %v1194 = vsel %vm973, %v1190, 0.0
        %v1195 = vsel %vm973, %v1191, 0.0
        %v1196 = vadd.f32 %v1194, %v1195
        %v1197 = vsel %vm973, %v1192, 0.0
        %v1198 = vadd.f32 %v1196, %v1197
        %v1199 = vsel %vm973, %v1193, 0.0
        %v1200 = vadd.f32 %v1198, %v1199
        %v1201 = vrot.slane %v1200, 4
        %v1202 = vadd.f32 %v1200, %v1201
        %v1203 = vrot.slane %v1202, 2
        %v1204 = vadd.f32 %v1202, %v1203
        %v1205 = vrot.slane %v1204, 1
        %v1206 = vadd.f32 %v1204, %v1205
        %v1207 = vrcp.pop 32.0
        %v1208 = vmul.f32 32.0, %v1207
        %v1209 = vsub.f32 1.0, %v1208
        %v1210 = vmul.f32 %v1207, %v1209
        %v1211 = vadd.f32 %v1207, %v1210
        %vm1212 = vweird.f32 %v1207
        %v1213 = vsel %vm1212, %v1207, %v1211
        %v1214 = vmul.f32 %v1206, %v1213
        %1215 = vxpose.xlu0.b32.start [1/16] %v1182, 128
        %1216 = vxpose.xlu0.b32.cont [2/16] %v1183, 128
        %1217 = vxpose.xlu0.b32.cont [3/16] %v1184, 128
        %1218 = vxpose.xlu0.b32.cont [4/16] %v1185, 128
        %1219 = vxpose.xlu0.b32.cont [5/16] 0.0, 128
        %1220 = vxpose.xlu0.b32.cont [6/16] 0.0, 128
        %1221 = vxpose.xlu0.b32.cont [7/16] 0.0, 128
        %1222 = vxpose.xlu0.b32.cont [8/16] 0.0, 128
        %1223 = vxpose.xlu0.b32.cont [9/16] 0.0, 128
        %1224 = vxpose.xlu0.b32.cont [10/16] 0.0, 128
        %1225 = vxpose.xlu0.b32.cont [11/16] 0.0, 128
        %1226 = vxpose.xlu0.b32.cont [12/16] 0.0, 128
        %1227 = vxpose.xlu0.b32.cont [13/16] 0.0, 128
        %1228 = vxpose.xlu0.b32.cont [14/16] 0.0, 128
        %1229 = vxpose.xlu0.b32.cont [15/16] 0.0, 128
        %1230 = vxpose.xlu0.b32.end [16/16] 0.0, 128
        %v1231 = vpop.trf.xlu0
        %v1232 = vpop.trf.xlu0
        %v1233 = vpop.trf.xlu0
        %v1234 = vpop.trf.xlu0
        %v1235 = vpop.trf.xlu0
        %v1236 = vpop.trf.xlu0
        %v1237 = vpop.trf.xlu0
        %v1238 = vpop.trf.xlu0
        %v1239 = vpop.trf.xlu0
        %v1240 = vpop.trf.xlu0
        %v1241 = vpop.trf.xlu0
        %v1242 = vpop.trf.xlu0
        %v1243 = vpop.trf.xlu0
        %v1244 = vpop.trf.xlu0
        %v1245 = vpop.trf.xlu0
        %v1246 = vpop.trf.xlu0
        %v1248 = vsel %vm928, %v1231, 0
        %v1251 = vsel %vm928, %v1232, 0
        %1253 = vmatpush.msra.mxu0 0.0
        %1254 = vmatpush.msra.mxu0 0.0
        %1255 = vmatpush.msra.mxu0 0.0
        %1256 = vmatpush.msra.mxu0 0.0
        %1257 = vmatpush.msra.mxu0 0.0
        %1258 = vmatpush.msra.mxu0 0.0
        %1259 = vmatpush.msra.mxu0 0.0
        %1260 = vmatpush.msra.mxu0 0.0
        %1261 = vmatpush.msra.mxu0 0.0
        %1262 = vmatpush.msra.mxu0 0.0
        %1263 = vmatpush.msra.mxu0 0.0
        %1264 = vmatpush.msra.mxu0 0.0
        %1265 = vmatpush.msra.mxu0 %v1189
        %1266 = vmatpush.msra.mxu0 %v1188
        %1267 = vmatpush.msra.mxu0 %v1187
        %1268 = vmatpush.msra.mxu0 %v1186
        %1269 = vmatmul.f32.gmra.mxu0 %v1248
        %v1270 = vpop.f32.mrf.mxu0
        %v1271 = vadd.f32 0.0, %v1270
        %1272 = vmatmul.f32.gmra.mxu0 %v1251
        %v1273 = vpop.f32.mrf.mxu0
        %v1274 = vadd.f32 0.0, %v1273
        %1275 = vdwg.mxu0
        %v1277 = vsel %vm973, %v470, 0
        %1279 = vmatpush.msra.mxu0 0.0
        %1280 = vmatpush.msra.mxu0 0.0
        %1281 = vmatpush.msra.mxu0 0.0
        %1282 = vmatpush.msra.mxu0 0.0
        %1283 = vmatpush.msra.mxu0 0.0
        %1284 = vmatpush.msra.mxu0 0.0
        %1285 = vmatpush.msra.mxu0 0.0
        %1286 = vmatpush.msra.mxu0 0.0
        %1287 = vmatpush.msra.mxu0 0.0
        %1288 = vmatpush.msra.mxu0 0.0
        %1289 = vmatpush.msra.mxu0 0.0
        %1290 = vmatpush.msra.mxu0 0.0
        %1291 = vmatpush.msra.mxu0 0.0
        %1292 = vmatpush.msra.mxu0 0.0
        %1293 = vmatpush.msra.mxu0 %v1274
        %1294 = vmatpush.msra.mxu0 %v1271
        %1295 = vmatmul.f32.gmra.mxu0 %v1277
        %v1296 = vpop.f32.mrf.mxu0
        %v1297 = vadd.f32 0.0, %v1296
        %1298 = vdwg.mxu0
        %v1300 = vsel %vm973, %v468, 0
        %v1303 = vsel %vm973, %v1271, 0
        %v1306 = vsel %vm973, %v1274, 0
        %1308 = vmatpush.xpose.msra.mxu0 0.0
        %1309 = vmatpush.xpose.msra.mxu0 0.0
        %1310 = vmatpush.xpose.msra.mxu0 0.0
        %1311 = vmatpush.xpose.msra.mxu0 0.0
        %1312 = vmatpush.xpose.msra.mxu0 0.0
        %1313 = vmatpush.xpose.msra.mxu0 0.0
        %1314 = vmatpush.xpose.msra.mxu0 0.0
        %1315 = vmatpush.xpose.msra.mxu0 0.0
        %1316 = vmatpush.xpose.msra.mxu0 0.0
        %1317 = vmatpush.xpose.msra.mxu0 0.0
        %1318 = vmatpush.xpose.msra.mxu0 0.0
        %1319 = vmatpush.xpose.msra.mxu0 0.0
        %1320 = vmatpush.xpose.msra.mxu0 0.0
        %1321 = vmatpush.xpose.msra.mxu0 0.0
        %1322 = vmatpush.xpose.msra.mxu0 %v1306
        %1323 = vmatpush.xpose.msra.mxu0 %v1303
        %1324 = vmatmul.f32.gmra.mxu0 %v1300
        %v1325 = vpop.f32.mrf.mxu0
        %v1326 = vadd.f32 %v1297, %v1325
        %1327 = vdwg.mxu0
        %v1328 = vadd.f32 %v1326, %v1077
        %v1329 = vmax.f32 %v1328, 0.0
        %v1330 = vmul.f32 %v1081, %v1214
        %v1332 = vsel %vm637, %v474, 0
        %1334 = vmatpush.msra.mxu0 0.0
        %1335 = vmatpush.msra.mxu0 0.0
        %1336 = vmatpush.msra.mxu0 0.0
        %1337 = vmatpush.msra.mxu0 0.0
        %1338 = vmatpush.msra.mxu0 0.0
        %1339 = vmatpush.msra.mxu0 0.0
        %1340 = vmatpush.msra.mxu0 0.0
        %1341 = vmatpush.msra.mxu0 0.0
        %1342 = vmatpush.msra.mxu0 0.0
        %1343 = vmatpush.msra.mxu0 0.0
        %1344 = vmatpush.msra.mxu0 0.0
        %1345 = vmatpush.msra.mxu0 0.0
        %1346 = vmatpush.msra.mxu0 0.0
        %1347 = vmatpush.msra.mxu0 0.0
        %1348 = vmatpush.msra.mxu0 0.0
        %1349 = vmatpush.msra.mxu0 %v1329
        %1350 = vmatmul.f32.gmra.mxu0 %v1332
        %v1351 = vpop.f32.mrf.mxu0
        %v1352 = vadd.f32 0.0, %v1351
        %1353 = vdwg.mxu0
        %v1354 = vadd.f32 %v1330, %v1352
        %v1355 = vadd.f32 %v1354, %v1085
        %v1356 = vmax.f32 %v1355, 0.0
        %v1357 = vstv %s458
        %1358 = vxpose.xlu0.b32.start [1/16] %v1356, 128
        %1359 = vxpose.xlu0.b32.cont [2/16] 0.0, 128
        %1360 = vxpose.xlu0.b32.cont [3/16] 0.0, 128
        %1361 = vxpose.xlu0.b32.cont [4/16] 0.0, 128
        %1362 = vxpose.xlu0.b32.cont [5/16] 0.0, 128
        %1363 = vxpose.xlu0.b32.cont [6/16] 0.0, 128
        %1364 = vxpose.xlu0.b32.cont [7/16] 0.0, 128
        %1365 = vxpose.xlu0.b32.cont [8/16] 0.0, 128
        %1366 = vxpose.xlu0.b32.cont [9/16] 0.0, 128
        %1367 = vxpose.xlu0.b32.cont [10/16] 0.0, 128
        %1368 = vxpose.xlu0.b32.cont [11/16] 0.0, 128
        %1369 = vxpose.xlu0.b32.cont [12/16] 0.0, 128
        %1370 = vxpose.xlu0.b32.cont [13/16] 0.0, 128
        %1371 = vxpose.xlu0.b32.cont [14/16] 0.0, 128
        %1372 = vxpose.xlu0.b32.cont [15/16] 0.0, 128
        %1373 = vxpose.xlu0.b32.end [16/16] 0.0, 128
        %v1374 = vpop.trf.xlu0
        %v1375 = vpop.trf.xlu0
        %v1376 = vpop.trf.xlu0
        %v1377 = vpop.trf.xlu0
        %v1378 = vpop.trf.xlu0
        %v1379 = vpop.trf.xlu0
        %v1380 = vpop.trf.xlu0
        %v1381 = vpop.trf.xlu0
        %v1382 = vpop.trf.xlu0
        %v1383 = vpop.trf.xlu0
        %v1384 = vpop.trf.xlu0
        %v1385 = vpop.trf.xlu0
        %v1386 = vpop.trf.xlu0
        %v1387 = vpop.trf.xlu0
        %v1388 = vpop.trf.xlu0
        %v1389 = vpop.trf.xlu0
        %vm1390 = vcmask 31744
        %v1392 = vsel %vm1390, %v1374, 0
        %v1395 = vsel %vm1390, %v1375, 0
        %vm1397 = vcmask 1043456
        %v1399 = vsel %vm1397, %v475, 0
        %1401 = vmatpush.msra.mxu0 0.0
        %1402 = vmatpush.msra.mxu0 0.0
        %1403 = vmatpush.msra.mxu0 0.0
        %1404 = vmatpush.msra.mxu0 0.0
        %1405 = vmatpush.msra.mxu0 0.0
        %1406 = vmatpush.msra.mxu0 0.0
        %1407 = vmatpush.msra.mxu0 0.0
        %1408 = vmatpush.msra.mxu0 0.0
        %1409 = vmatpush.msra.mxu0 0.0
        %1410 = vmatpush.msra.mxu0 0.0
        %1411 = vmatpush.msra.mxu0 0.0
        %1412 = vmatpush.msra.mxu0 0.0
        %1413 = vmatpush.msra.mxu0 0.0
        %1414 = vmatpush.msra.mxu0 0.0
        %1415 = vmatpush.msra.mxu0 0.0
        %1416 = vmatpush.msra.mxu0 %v1399
        %1417 = vmatmul.f32.gmra.mxu0 %v1392
        %v1418 = vpop.f32.mrf.mxu0
        %v1419 = vadd.f32 %v1357, %v1418
        %1420 = vmatmul.f32.gmra.mxu0 %v1395
        %v1421 = vpop.f32.mrf.mxu0
        %v1422 = vadd.f32 %v1357, %v1421
        %1423 = vdwg.mxu0
        %v1424 = vxor.u32 %v1419, 2147483648
        %v1425 = vxor.u32 %v1422, 2147483648
        %v1426 = vmul.f32 %v1424, 1.442695
        %v1427 = vpow.pop %v1426
        %v1428 = vmul.f32 %v1425, 1.442695
        %v1429 = vpow.pop %v1428
        %v1430 = vadd.f32 %v1427, 1.0
        %v1431 = vadd.f32 %v1429, 1.0
        %v1432 = vrcp.pop %v1430
        %v1433 = vmul.f32 %v1430, %v1432
        %v1434 = vsub.f32 1.0, %v1433
        %v1435 = vmul.f32 %v1432, %v1434
        %v1436 = vadd.f32 %v1432, %v1435
        %vm1437 = vweird.f32 %v1430
        %vm1438 = vweird.f32 %v1432
        %vm1439 = vmor %vm1437, %vm1438
        %v1440 = vsel %vm1439, %v1432, %v1436
        %v1441 = vand.u32 2147483647, %v1430
        %vm1442 = vcmp.eq.f32.partialorder %v1441, 8.507059e+37
        %v1443 = vand.u32 %v1430, 2147483648
        %v1444 = vor.u32 1.1754944e-38, %v1443
        %v1445 = vsel %vm1442, %v1444, %v1440
        %v1446 = vmul.f32 1.0, %v1445
        %v1447 = vrcp.pop %v1431
        %v1448 = vmul.f32 %v1431, %v1447
        %v1449 = vsub.f32 1.0, %v1448
        %v1450 = vmul.f32 %v1447, %v1449
        %v1451 = vadd.f32 %v1447, %v1450
        %vm1452 = vweird.f32 %v1431
        %vm1453 = vweird.f32 %v1447
        %vm1454 = vmor %vm1452, %vm1453
        %v1455 = vsel %vm1454, %v1447, %v1451
        %v1456 = vand.u32 2147483647, %v1431
        %vm1457 = vcmp.eq.f32.partialorder %v1456, 8.507059e+37
        %v1458 = vand.u32 %v1431, 2147483648
        %v1459 = vor.u32 1.1754944e-38, %v1458
        %v1460 = vsel %vm1457, %v1459, %v1455
        %v1461 = vmul.f32 1.0, %v1460
        %1463 = vset.pattern.permute.xlu0 0
        %1464 = vperm.xlu0 %1463, %v1446
        %v1465 = vpop.permute.xlu0 %1464
        %1468 = vset.pattern.permute.xlu0 0
        %1469 = vperm.xlu0 %1468, %v1461
        %v1470 = vpop.permute.xlu0 %1469
        %v1472 = vmul.f32 %v1465, %v1017
        %v1473 = vmul.f32 %v1470, %v1018
        %1474 = vrot.lane.b32.xlu0 %v1017, 64
        %v1475 = vpop.permute.xlu0 %1474
        %1476 = vrot.lane.b32.xlu0 %v1018, 64
        %v1477 = vpop.permute.xlu0 %1476
        %v1478 = vsel %vm548, %v1475, 0
        %v1480 = vsel %vm548, %v1477, 0
        %1482 = vmatpush.xpose.msra.mxu0 0.0
        %1483 = vmatpush.xpose.msra.mxu0 0.0
        %1484 = vmatpush.xpose.msra.mxu0 0.0
        %1485 = vmatpush.xpose.msra.mxu0 0.0
        %1486 = vmatpush.xpose.msra.mxu0 0.0
        %1487 = vmatpush.xpose.msra.mxu0 0.0
        %1488 = vmatpush.xpose.msra.mxu0 0.0
        %1489 = vmatpush.xpose.msra.mxu0 0.0
        %1490 = vmatpush.xpose.msra.mxu0 0.0
        %1491 = vmatpush.xpose.msra.mxu0 0.0
        %1492 = vmatpush.xpose.msra.mxu0 0.0
        %1493 = vmatpush.xpose.msra.mxu0 0.0
        %1494 = vmatpush.xpose.msra.mxu0 0.0
        %1495 = vmatpush.xpose.msra.mxu0 0.0
        %1496 = vmatpush.xpose.msra.mxu0 %v1480
        %1497 = vmatpush.xpose.msra.mxu0 %v1478
        %1498 = vmatmul.f32.gmra.mxu0 %v1088
        %v1499 = vpop.f32.mrf.mxu0
        %v1500 = vadd.f32 %v1021, %v1499
        %1501 = vmatmul.f32.gmra.mxu0 %v1091
        %v1502 = vpop.f32.mrf.mxu0
        %v1503 = vadd.f32 %v1025, %v1502
        %1504 = vmatmul.f32.gmra.mxu0 %v1094
        %v1505 = vpop.f32.mrf.mxu0
        %v1506 = vadd.f32 %v1029, %v1505
        %1507 = vmatmul.f32.gmra.mxu0 %v1097
        %v1508 = vpop.f32.mrf.mxu0
        %v1509 = vadd.f32 %v1033, %v1508
        %1510 = vmatmul.f32.gmra.mxu0 %v1100
        %v1511 = vpop.f32.mrf.mxu0
        %v1512 = vadd.f32 %v1038, %v1511
        %1513 = vmatmul.f32.gmra.mxu0 %v1103
        %v1514 = vpop.f32.mrf.mxu0
        %v1515 = vadd.f32 %v1043, %v1514
        %1516 = vmatmul.f32.gmra.mxu0 %v1106
        %v1517 = vpop.f32.mrf.mxu0
        %v1518 = vadd.f32 %v1048, %v1517
        %1519 = vmatmul.f32.gmra.mxu0 %v1109
        %v1520 = vpop.f32.mrf.mxu0
        %v1521 = vadd.f32 %v1053, %v1520
        %1522 = vmatmul.f32.gmra.mxu0 %v1112
        %v1523 = vpop.f32.mrf.mxu0
        %v1524 = vadd.f32 %v1058, %v1523
        %1525 = vmatmul.f32.gmra.mxu0 %v1115
        %v1526 = vpop.f32.mrf.mxu0
        %v1527 = vadd.f32 %v1063, %v1526
        %1528 = vmatmul.f32.gmra.mxu0 %v1118
        %v1529 = vpop.f32.mrf.mxu0
        %v1530 = vadd.f32 %v1068, %v1529
        %1531 = vmatmul.f32.gmra.mxu0 %v1121
        %v1532 = vpop.f32.mrf.mxu0
        %v1533 = vadd.f32 %v1073, %v1532
        %1534 = vdwg.mxu0
        %v1535 = vmax.f32 %v1500, 0.0
        %v1536 = vmax.f32 %v1503, 0.0
        %v1537 = vmax.f32 %v1506, 0.0
        %v1538 = vmax.f32 %v1509, 0.0
        %v1539 = vmax.f32 %v1512, 0.0
        %v1540 = vmax.f32 %v1515, 0.0
        %v1541 = vmax.f32 %v1518, 0.0
        %v1542 = vmax.f32 %v1521, 0.0
        %v1543 = vmax.f32 %v1524, 0.0
        %v1544 = vmax.f32 %v1527, 0.0
        %v1545 = vmax.f32 %v1530, 0.0
        %v1546 = vmax.f32 %v1533, 0.0
        %v1547 = vsel %vm973, %v1543, 0.0
        %v1548 = vsel %vm973, %v1544, 0.0
        %v1549 = vadd.f32 %v1547, %v1548
        %v1550 = vsel %vm973, %v1545, 0.0
        %v1551 = vadd.f32 %v1549, %v1550
        %v1552 = vsel %vm973, %v1546, 0.0
        %v1553 = vadd.f32 %v1551, %v1552
        %v1554 = vrot.slane %v1553, 4
        %v1555 = vadd.f32 %v1553, %v1554
        %v1556 = vrot.slane %v1555, 2
        %v1557 = vadd.f32 %v1555, %v1556
        %v1558 = vrot.slane %v1557, 1
        %v1559 = vadd.f32 %v1557, %v1558
        %v1560 = vmul.f32 %v1559, %v1213
        %1561 = vxpose.xlu0.b32.start [1/16] %v1535, 128
        %1562 = vxpose.xlu0.b32.cont [2/16] %v1536, 128
        %1563 = vxpose.xlu0.b32.cont [3/16] %v1537, 128
        %1564 = vxpose.xlu0.b32.cont [4/16] %v1538, 128
        %1565 = vxpose.xlu0.b32.cont [5/16] 0.0, 128
        %1566 = vxpose.xlu0.b32.cont [6/16] 0.0, 128
        %1567 = vxpose.xlu0.b32.cont [7/16] 0.0, 128
        %1568 = vxpose.xlu0.b32.cont [8/16] 0.0, 128
        %1569 = vxpose.xlu0.b32.cont [9/16] 0.0, 128
        %1570 = vxpose.xlu0.b32.cont [10/16] 0.0, 128
        %1571 = vxpose.xlu0.b32.cont [11/16] 0.0, 128
        %1572 = vxpose.xlu0.b32.cont [12/16] 0.0, 128
        %1573 = vxpose.xlu0.b32.cont [13/16] 0.0, 128
        %1574 = vxpose.xlu0.b32.cont [14/16] 0.0, 128
        %1575 = vxpose.xlu0.b32.cont [15/16] 0.0, 128
        %1576 = vxpose.xlu0.b32.end [16/16] 0.0, 128
        %v1577 = vpop.trf.xlu0
        %v1578 = vpop.trf.xlu0
        %v1579 = vpop.trf.xlu0
        %v1580 = vpop.trf.xlu0
        %v1581 = vpop.trf.xlu0
        %v1582 = vpop.trf.xlu0
        %v1583 = vpop.trf.xlu0
        %v1584 = vpop.trf.xlu0
        %v1585 = vpop.trf.xlu0
        %v1586 = vpop.trf.xlu0
        %v1587 = vpop.trf.xlu0
        %v1588 = vpop.trf.xlu0
        %v1589 = vpop.trf.xlu0
        %v1590 = vpop.trf.xlu0
        %v1591 = vpop.trf.xlu0
        %v1592 = vpop.trf.xlu0
        %v1594 = vsel %vm928, %v1577, 0
        %v1597 = vsel %vm928, %v1578, 0
        %1599 = vmatpush.msra.mxu0 0.0
        %1600 = vmatpush.msra.mxu0 0.0
        %1601 = vmatpush.msra.mxu0 0.0
        %1602 = vmatpush.msra.mxu0 0.0
        %1603 = vmatpush.msra.mxu0 0.0
        %1604 = vmatpush.msra.mxu0 0.0
        %1605 = vmatpush.msra.mxu0 0.0
        %1606 = vmatpush.msra.mxu0 0.0
        %1607 = vmatpush.msra.mxu0 0.0
        %1608 = vmatpush.msra.mxu0 0.0
        %1609 = vmatpush.msra.mxu0 0.0
        %1610 = vmatpush.msra.mxu0 0.0
        %1611 = vmatpush.msra.mxu0 %v1542
        %1612 = vmatpush.msra.mxu0 %v1541
        %1613 = vmatpush.msra.mxu0 %v1540
        %1614 = vmatpush.msra.mxu0 %v1539
        %1615 = vmatmul.f32.gmra.mxu0 %v1594
        %v1616 = vpop.f32.mrf.mxu0
        %v1617 = vadd.f32 0.0, %v1616
        %1618 = vmatmul.f32.gmra.mxu0 %v1597
        %v1619 = vpop.f32.mrf.mxu0
        %v1620 = vadd.f32 0.0, %v1619
        %1621 = vdwg.mxu0
        %1622 = vmatpush.msra.mxu0 0.0
        %1623 = vmatpush.msra.mxu0 0.0
        %1624 = vmatpush.msra.mxu0 0.0
        %1625 = vmatpush.msra.mxu0 0.0
        %1626 = vmatpush.msra.mxu0 0.0
        %1627 = vmatpush.msra.mxu0 0.0
        %1628 = vmatpush.msra.mxu0 0.0
        %1629 = vmatpush.msra.mxu0 0.0
        %1630 = vmatpush.msra.mxu0 0.0
        %1631 = vmatpush.msra.mxu0 0.0
        %1632 = vmatpush.msra.mxu0 0.0
        %1633 = vmatpush.msra.mxu0 0.0
        %1634 = vmatpush.msra.mxu0 0.0
        %1635 = vmatpush.msra.mxu0 0.0
        %1636 = vmatpush.msra.mxu0 %v1620
        %1637 = vmatpush.msra.mxu0 %v1617
        %1638 = vmatmul.f32.gmra.mxu0 %v1277
        %v1639 = vpop.f32.mrf.mxu0
        %v1640 = vadd.f32 0.0, %v1639
        %1641 = vdwg.mxu0
        %v1643 = vsel %vm973, %v1617, 0
        %v1646 = vsel %vm973, %v1620, 0
        %1648 = vmatpush.xpose.msra.mxu0 0.0
        %1649 = vmatpush.xpose.msra.mxu0 0.0
        %1650 = vmatpush.xpose.msra.mxu0 0.0
        %1651 = vmatpush.xpose.msra.mxu0 0.0
        %1652 = vmatpush.xpose.msra.mxu0 0.0
        %1653 = vmatpush.xpose.msra.mxu0 0.0
        %1654 = vmatpush.xpose.msra.mxu0 0.0
        %1655 = vmatpush.xpose.msra.mxu0 0.0
        %1656 = vmatpush.xpose.msra.mxu0 0.0
        %1657 = vmatpush.xpose.msra.mxu0 0.0
        %1658 = vmatpush.xpose.msra.mxu0 0.0
        %1659 = vmatpush.xpose.msra.mxu0 0.0
        %1660 = vmatpush.xpose.msra.mxu0 0.0
        %1661 = vmatpush.xpose.msra.mxu0 0.0
        %1662 = vmatpush.xpose.msra.mxu0 %v1646
        %1663 = vmatpush.xpose.msra.mxu0 %v1643
        %1664 = vmatmul.f32.gmra.mxu0 %v1300
        %v1665 = vpop.f32.mrf.mxu0
        %v1666 = vadd.f32 %v1640, %v1665
        %1667 = vdwg.mxu0
        %v1668 = vadd.f32 %v1666, %v1077
        %v1669 = vmax.f32 %v1668, 0.0
        %v1670 = vmul.f32 %v1081, %v1560
        %1671 = vmatpush.msra.mxu0 0.0
        %1672 = vmatpush.msra.mxu0 0.0
        %1673 = vmatpush.msra.mxu0 0.0
        %1674 = vmatpush.msra.mxu0 0.0
        %1675 = vmatpush.msra.mxu0 0.0
        %1676 = vmatpush.msra.mxu0 0.0
        %1677 = vmatpush.msra.mxu0 0.0
        %1678 = vmatpush.msra.mxu0 0.0
        %1679 = vmatpush.msra.mxu0 0.0
        %1680 = vmatpush.msra.mxu0 0.0
        %1681 = vmatpush.msra.mxu0 0.0
        %1682 = vmatpush.msra.mxu0 0.0
        %1683 = vmatpush.msra.mxu0 0.0
        %1684 = vmatpush.msra.mxu0 0.0
        %1685 = vmatpush.msra.mxu0 0.0
        %1686 = vmatpush.msra.mxu0 %v1669
        %1687 = vmatmul.f32.gmra.mxu0 %v1332
        %v1688 = vpop.f32.mrf.mxu0
        %v1689 = vadd.f32 0.0, %v1688
        %1690 = vdwg.mxu0
        %v1691 = vadd.f32 %v1670, %v1689
        %v1692 = vadd.f32 %v1691, %v1085
        %v1693 = vmax.f32 %v1692, 0.0
        %1694 = vxpose.xlu0.b32.start [1/16] %v1693, 128
        %1695 = vxpose.xlu0.b32.cont [2/16] 0.0, 128
        %1696 = vxpose.xlu0.b32.cont [3/16] 0.0, 128
        %1697 = vxpose.xlu0.b32.cont [4/16] 0.0, 128
        %1698 = vxpose.xlu0.b32.cont [5/16] 0.0, 128
        %1699 = vxpose.xlu0.b32.cont [6/16] 0.0, 128
        %1700 = vxpose.xlu0.b32.cont [7/16] 0.0, 128
        %1701 = vxpose.xlu0.b32.cont [8/16] 0.0, 128
        %1702 = vxpose.xlu0.b32.cont [9/16] 0.0, 128
        %1703 = vxpose.xlu0.b32.cont [10/16] 0.0, 128
        %1704 = vxpose.xlu0.b32.cont [11/16] 0.0, 128
        %1705 = vxpose.xlu0.b32.cont [12/16] 0.0, 128
        %1706 = vxpose.xlu0.b32.cont [13/16] 0.0, 128
        %1707 = vxpose.xlu0.b32.cont [14/16] 0.0, 128
        %1708 = vxpose.xlu0.b32.cont [15/16] 0.0, 128
        %1709 = vxpose.xlu0.b32.end [16/16] 0.0, 128
        %v1710 = vpop.trf.xlu0
        %v1711 = vpop.trf.xlu0
        %v1712 = vpop.trf.xlu0
        %v1713 = vpop.trf.xlu0
        %v1714 = vpop.trf.xlu0
        %v1715 = vpop.trf.xlu0
        %v1716 = vpop.trf.xlu0
        %v1717 = vpop.trf.xlu0
        %v1718 = vpop.trf.xlu0
        %v1719 = vpop.trf.xlu0
        %v1720 = vpop.trf.xlu0
        %v1721 = vpop.trf.xlu0
        %v1722 = vpop.trf.xlu0
        %v1723 = vpop.trf.xlu0
        %v1724 = vpop.trf.xlu0
        %v1725 = vpop.trf.xlu0
        %v1727 = vsel %vm1390, %v1710, 0
        %v1730 = vsel %vm1390, %v1711, 0
        %1732 = vmatpush.msra.mxu0 0.0
        %1733 = vmatpush.msra.mxu0 0.0
        %1734 = vmatpush.msra.mxu0 0.0
        %1735 = vmatpush.msra.mxu0 0.0
        %1736 = vmatpush.msra.mxu0 0.0
        %1737 = vmatpush.msra.mxu0 0.0
        %1738 = vmatpush.msra.mxu0 0.0
        %1739 = vmatpush.msra.mxu0 0.0
        %1740 = vmatpush.msra.mxu0 0.0
        %1741 = vmatpush.msra.mxu0 0.0
        %1742 = vmatpush.msra.mxu0 0.0
        %1743 = vmatpush.msra.mxu0 0.0
        %1744 = vmatpush.msra.mxu0 0.0
        %1745 = vmatpush.msra.mxu0 0.0
        %1746 = vmatpush.msra.mxu0 0.0
        %1747 = vmatpush.msra.mxu0 %v1399
        %1748 = vmatmul.f32.gmra.mxu0 %v1727
        %v1749 = vpop.f32.mrf.mxu0
        %v1750 = vadd.f32 %v1357, %v1749
        %1751 = vmatmul.f32.gmra.mxu0 %v1730
        %v1752 = vpop.f32.mrf.mxu0
        %v1753 = vadd.f32 %v1357, %v1752
        %1754 = vdwg.mxu0
        %v1755 = vxor.u32 %v1750, 2147483648
        %v1756 = vxor.u32 %v1753, 2147483648
        %v1757 = vmul.f32 %v1755, 1.442695
        %v1758 = vpow.pop %v1757
        %v1759 = vmul.f32 %v1756, 1.442695
        %v1760 = vpow.pop %v1759
        %v1761 = vadd.f32 %v1758, 1.0
        %v1762 = vadd.f32 %v1760, 1.0
        %v1763 = vrcp.pop %v1761
        %v1764 = vmul.f32 %v1761, %v1763
        %v1765 = vsub.f32 1.0, %v1764
        %v1766 = vmul.f32 %v1763, %v1765
        %v1767 = vadd.f32 %v1763, %v1766
        %vm1768 = vweird.f32 %v1761
        %vm1769 = vweird.f32 %v1763
        %vm1770 = vmor %vm1768, %vm1769
        %v1771 = vsel %vm1770, %v1763, %v1767
        %v1772 = vand.u32 2147483647, %v1761
        %vm1773 = vcmp.eq.f32.partialorder %v1772, 8.507059e+37
        %v1774 = vand.u32 %v1761, 2147483648
        %v1775 = vor.u32 1.1754944e-38, %v1774
        %v1776 = vsel %vm1773, %v1775, %v1771
        %v1777 = vmul.f32 1.0, %v1776
        %v1778 = vrcp.pop %v1762
        %v1779 = vmul.f32 %v1762, %v1778
        %v1780 = vsub.f32 1.0, %v1779
        %v1781 = vmul.f32 %v1778, %v1780
        %v1782 = vadd.f32 %v1778, %v1781
        %vm1783 = vweird.f32 %v1762
        %vm1784 = vweird.f32 %v1778
        %vm1785 = vmor %vm1783, %vm1784
        %v1786 = vsel %vm1785, %v1778, %v1782
        %v1787 = vand.u32 2147483647, %v1762
        %vm1788 = vcmp.eq.f32.partialorder %v1787, 8.507059e+37
        %v1789 = vand.u32 %v1762, 2147483648
        %v1790 = vor.u32 1.1754944e-38, %v1789
        %v1791 = vsel %vm1788, %v1790, %v1786
        %v1792 = vmul.f32 1.0, %v1791
        %1794 = vset.pattern.permute.xlu0 0
        %1795 = vperm.xlu0 %1794, %v1777
        %v1796 = vpop.permute.xlu0 %1795
        %1799 = vset.pattern.permute.xlu0 0
        %1800 = vperm.xlu0 %1799, %v1792
        %v1801 = vpop.permute.xlu0 %1800
        %v1803 = vmul.f32 %v1796, %v1017
        %v1804 = vmul.f32 %v1801, %v1018
        %v1805 = vsel %vm548, %v1472, %v1803
        %v1806 = vsel %vm548, %v1473, %v1804
        %1807 = vst [vmem:[%s441] sm:$0xff] %v1805
        %1808 = vst [vmem:[%s441 + $0x8] sm:$0xff] %v1806
        %s1809 = sand.u32 %s270, 1
        %s1810 = scalar_lea.sflag [#allocation4], %s1809
        %s1811 = sand.u32 %s270, 1
        %s1812 = smul.addr %s1811, 16
        %s1813 = scalar_lea.vmem [#allocation6], %s1812
        // Predicated region
        $region107: #{tpu_custom_call.1} parent=97 // pred_check
          %p1814 = pneg %p280
        $region108: #{tpu_custom_call.1} parent=97 // pred_check_branch
          %1816 = sbr.rel (%p1814) target = $region110
        $region109: #{tpu_custom_call.1} parent=97 // pred_region
          %1818 = vsyncadd %s1810, 0
          %s1819 = smul.addr %s26, 8
          %s1820 = scalar_lea.hbm %s11, %s1819
          %s1821 = sshll.u32 %s1813, 4
          %s1822 = int_to_ptr.vmem [resolvable:$true] %s1821
          %s1823 = sshll.u32 %s1820, 4
          %s1824 = int_to_ptr.hbm [resolvable:$true] %s1823
          %1829 = dma.vmem_to_hbm [thread:$0]  %s1822, 256, %s1824, %s1810, 128, 256, 8
        $region110: #{tpu_custom_call.1} parent=97 // pred_fallthru
          _
      $region98: #{tpu_custom_call.1} parent=5 // pred_fallthru
        _
      %p1830 = scmp.le.s32.totalorder 2, %s21
      // Predicated region
      $region111: #{tpu_custom_call.1} parent=5 // pred_check
        %p1831 = pneg %p1830
      $region112: #{tpu_custom_call.1} parent=5 // pred_check_branch
        %1833 = sbr.rel (%p1831) target = $region114
      $region113: #{tpu_custom_call.1} parent=5 // pred_region
        %s1834 = ssub.s32 %s21, 2
        // Predicated region
        $region115: #{tpu_custom_call.1} parent=113 // pred_check
          %p1835 = pneg %p286
        $region116: #{tpu_custom_call.1} parent=113 // pred_check_branch
          %1837 = sbr.rel (%p1835) target = $region118
        $region117: #{tpu_custom_call.1} parent=113 // pred_region
          %s1838 = sand.u32 %s271, 1
          %s1839 = scalar_lea.sflag [#allocation4], %s1838
          %s1840 = sand.u32 %s271, 1
          %s1841 = smul.addr %s1840, 16
          %s1842 = scalar_lea.vmem [#allocation6], %s1841
          %1844 = dma.done %s1839, 256
        $region118: #{tpu_custom_call.1} parent=113 // pred_fallthru
          _
      $region114: #{tpu_custom_call.1} parent=5 // pred_fallthru
        _
    $region6: #{tpu_custom_call.1} parent=1 // loop_footer
      %s25 = sadd.s32 1, %s21
    $region7: #{tpu_custom_call.1} parent=1 // loop_footer_branch
      %20 = sbr.rel target = $region3
    $region8: #{tpu_custom_call.1} parent=1 // loop_exit
      _
    %1845 = vsyncpa [#allocation4], 1
    %s1846 = scalar_lea.sflag [#allocation4], 1
    %1847 = vsyncpa %s1846, 1
    %1848 = vsyncpa [#allocation5], 1
    %s1849 = scalar_lea.sflag [#allocation5], 1
    %1850 = vsyncpa %s1849, 1

</llo_original>
